<compile_context>
chip_gen: v6e
topology: v6e:2x2x1
jax: 0.10.0
libtpu: 0.0.40
codegen_flags: <defaults>
</compile_context>

<pallas_src>
import jax
import jax.numpy as jnp
from jax.experimental import pallas as pl
from jax.experimental.pallas import tpu as pltpu

EPS = 1e-5
_VMEM = pl.BlockSpec(memory_space=pltpu.MemorySpace.VMEM)


def _bn_relu(z, gamma, beta):
    """BatchNorm1d (train-mode, biased var) + ReLU, fused to one FMA pass."""
    inv_n = 1.0 / z.shape[0]
    mean = jnp.sum(z, axis=0, keepdims=True) * inv_n
    var = jnp.sum(z * z, axis=0, keepdims=True) * inv_n - mean * mean
    inv = jax.lax.rsqrt(var + EPS)          # EUP
    scale = gamma * inv                     # (1, F)
    shift = beta - mean * scale             # (1, F)
    return jnp.maximum(z * scale + shift, 0.0)


def _linear_bn_relu(h, w, gamma, beta):
    # Linear bias intentionally omitted: a per-feature constant added before
    # BatchNorm is exactly cancelled by the mean subtraction.
    z = jnp.dot(h, w, preferred_element_type=jnp.float32)
    return _bn_relu(z, gamma, beta)


def _feature_kernel(img_ref, text_ref,
                    wi1, gi1, bei1, wi2, gi2, bei2, wi3, gi3, bei3,
                    wt1, gt1, bet1, wt2, gt2, bet2, wt3, gt3, bet3,
                    wr1a, wr1b,
                    a_ref, b_ref):
    # ImageDNN: 3 x (Linear -> BN(train) -> ReLU)
    hi = img_ref[...]
    hi = _linear_bn_relu(hi, wi1[...], gi1[...], bei1[...])
    hi = _linear_bn_relu(hi, wi2[...], gi2[...], bei2[...])
    hi = _linear_bn_relu(hi, wi3[...], gi3[...], bei3[...])
    # TextDNN: 3 x (Linear -> BN(train) -> ReLU)
    ht = text_ref[...]
    ht = _linear_bn_relu(ht, wt1[...], gt1[...], bet1[...])
    ht = _linear_bn_relu(ht, wt2[...], gt2[...], bet2[...])
    ht = _linear_bn_relu(ht, wt3[...], gt3[...], bet3[...])
    # RelationDNN layer-1 matmul, decomposed over the concatenation:
    # project each modality once ((ni + nt) rows) instead of ni*nt rows.
    # (Bias of this layer also cancels under the following BatchNorm.)
    a_ref[...] = jnp.dot(hi, wr1a[...], preferred_element_type=jnp.float32)
    b_ref[...] = jnp.dot(ht, wr1b[...], preferred_element_type=jnp.float32)


def _relation_kernel(z1_ref, gr1, ber1, wr2, gr2, ber2, wr3, bias3, o_ref):
    # z1_ref already holds the pre-BN activation of relation layer 1.
    h = _bn_relu(z1_ref[...], gr1[...], ber1[...])
    h = _linear_bn_relu(h, wr2[...], gr2[...], ber2[...])
    # Final Linear of RelationDNN has no BN/ReLU -> keep its bias.
    o_ref[...] = (jnp.dot(h, wr3[...], preferred_element_type=jnp.float32)
                  + bias3[...]).astype(o_ref.dtype)


def model_forward(img, text, params):
    """Pallas forward of Model(img, text) with return_relation_score=True."""
    (wi1, _, gi1, bei1), (wi2, _, gi2, bei2), (wi3, _, gi3, bei3) = params["image"]
    (wt1, _, gt1, bet1), (wt2, _, gt2, bet2), (wt3, _, gt3, bet3) = params["text"]
    (wr1, _, gr1, ber1), (wr2, _, gr2, ber2), (wr3, br3) = params["relation"]

    ni, nt = img.shape[0], text.shape[0]
    di = wi3.shape[1]
    hr = wr1.shape[1]
    out_r = wr3.shape[1]

    wr1a = wr1[:di]   # image half of relation layer-1 weight
    wr1b = wr1[di:]   # text half

    a_proj, b_proj = pl.pallas_call(
        _feature_kernel,
        out_shape=(jax.ShapeDtypeStruct((ni, hr), jnp.float32),
                   jax.ShapeDtypeStruct((nt, hr), jnp.float32)),
        in_specs=[_VMEM] * 22,
        out_specs=(_VMEM, _VMEM),
    )(img, text,
      wi1, gi1, bei1, wi2, gi2, bei2, wi3, gi3, bei3,
      wt1, gt1, bet1, wt2, gt2, bet2, wt3, gt3, bet3,
      wr1a, wr1b)

    # Pairwise expansion (torch: unsqueeze/expand/reshape/cat) as a cheap
    # broadcast-add in XLA; row k = i*nt + j gets y_I[i]@W[:di] + y_T[j]@W[di:].
    z1_pre = (a_proj[:, None, :] + b_proj[None, :, :]).reshape(ni * nt, hr)

    return pl.pallas_call(
        _relation_kernel,
        out_shape=jax.ShapeDtypeStruct((ni * nt, out_r), jnp.float32),
        in_specs=[_VMEM] * 8,
        out_specs=_VMEM,
    )(z1_pre, gr1, ber1, wr2, gr2, ber2, wr3, br3)


def make_params(key, input_dim_I, input_dim_T,
                hidden_dim_I, hidden_dim_T, hidden_dim_R,
                output_dim_I, output_dim_T, output_dim_R):
    """PyTorch-like init. Linear weights stored as (in_features, out_features)."""
    def linear(k, fan_in, fan_out):
        kw, kb = jax.random.split(k)
        bound = fan_in ** -0.5
        w = jax.random.uniform(kw, (fan_in, fan_out), jnp.float32, -bound, bound)
        b = jax.random.uniform(kb, (1, fan_out), jnp.float32, -bound, bound)
        return w, b

    def bn(f):
        return jnp.ones((1, f), jnp.float32), jnp.zeros((1, f), jnp.float32)

    def dnn3(k0, k1, k2, d_in, d_h, d_out, last_has_bn):
        w1, b1 = linear(k0, d_in, d_h); g1, be1 = bn(d_h)
        w2, b2 = linear(k1, d_h, d_h);  g2, be2 = bn(d_h)
        w3, b3 = linear(k2, d_h, d_out)
        layers = [(w1, b1, g1, be1), (w2, b2, g2, be2)]
        if last_has_bn:
            g3, be3 = bn(d_out)
            layers.append((w3, b3, g3, be3))
        else:
            layers.append((w3, b3))
        return layers

    ks = jax.random.split(key, 9)
    return {
        "image": dnn3(ks[0], ks[1], ks[2], input_dim_I, hidden_dim_I, output_dim_I, True),
        "text": dnn3(ks[3], ks[4], ks[5], input_dim_T, hidden_dim_T, output_dim_T, True),
        "relation": dnn3(ks[6], ks[7], ks[8],
                         output_dim_I + output_dim_T, hidden_dim_R, output_dim_R, False),
    }


def reference(img, text, params):
    """Pure-JAX reference matching the PyTorch module exactly (biases included)."""
    def lin_bn_relu(h, w, b, g, be):
        z = h @ w + b
        m = z.mean(axis=0, keepdims=True)
        v = ((z - m) ** 2).mean(axis=0, keepdims=True)
        return jnp.maximum((z - m) / jnp.sqrt(v + EPS) * g + be, 0.0)

    def dnn_bn(h, layers):
        for (w, b, g, be) in layers:
            h = lin_bn_relu(h, w, b, g, be)
        return h

    y_I = dnn_bn(img, params["image"])
    y_T = dnn_bn(text, params["text"])

    ni, di = y_I.shape
    nt, dt = y_T.shape
    y = jnp.concatenate([jnp.repeat(y_I, nt, axis=0),
                         jnp.tile(y_T, (ni, 1))], axis=1)

    (w1, b1, g1, be1), (w2, b2, g2, be2), (w3, b3) = params["relation"]
    h = lin_bn_relu(y, w1, b1, g1, be1)
    h = lin_bn_relu(h, w2, b2, g2, be2)
    return h @ w3 + b3


if __name__ == "__main__":
    # Small, forward-consistent shapes (flattened 16x16 image features, etc.).
    ni, nt = 8, 8
    input_dim_I, input_dim_T = 256, 128
    hidden_dim_I = hidden_dim_T = hidden_dim_R = 128
    output_dim_I = output_dim_T = 64
    output_dim_R = 32

    key = jax.random.PRNGKey(0)
    k_img, k_txt, k_par = jax.random.split(key, 3)
    img = jax.random.normal(k_img, (ni, input_dim_I), jnp.float32)
    text = jax.random.normal(k_txt, (nt, input_dim_T), jnp.float32)
    params = make_params(k_par, input_dim_I, input_dim_T,
                         hidden_dim_I, hidden_dim_T, hidden_dim_R,
                         output_dim_I, output_dim_T, output_dim_R)

    out = jax.block_until_ready(model_forward(img, text, params))
    ref = reference(img, text, params)
    assert out.shape == (ni * nt, output_dim_R)
    assert jnp.allclose(out, ref, atol=2e-4, rtol=2e-4), "mismatch vs JAX reference"
    print("KERNEL_OK")
</pallas_src>

<mosaic_0001>
module attributes {stable_mosaic.version = 11 : i64} {
  func.func @_feature_kernel(%arg0: memref<8x256xf32, #tpu.memory_space<vmem>>, %arg1: memref<8x128xf32, #tpu.memory_space<vmem>>, %arg2: memref<256x128xf32, #tpu.memory_space<vmem>>, %arg3: memref<1x128xf32, #tpu.memory_space<vmem>>, %arg4: memref<1x128xf32, #tpu.memory_space<vmem>>, %arg5: memref<128x128xf32, #tpu.memory_space<vmem>>, %arg6: memref<1x128xf32, #tpu.memory_space<vmem>>, %arg7: memref<1x128xf32, #tpu.memory_space<vmem>>, %arg8: memref<128x64xf32, #tpu.memory_space<vmem>>, %arg9: memref<1x64xf32, #tpu.memory_space<vmem>>, %arg10: memref<1x64xf32, #tpu.memory_space<vmem>>, %arg11: memref<128x128xf32, #tpu.memory_space<vmem>>, %arg12: memref<1x128xf32, #tpu.memory_space<vmem>>, %arg13: memref<1x128xf32, #tpu.memory_space<vmem>>, %arg14: memref<128x128xf32, #tpu.memory_space<vmem>>, %arg15: memref<1x128xf32, #tpu.memory_space<vmem>>, %arg16: memref<1x128xf32, #tpu.memory_space<vmem>>, %arg17: memref<128x64xf32, #tpu.memory_space<vmem>>, %arg18: memref<1x64xf32, #tpu.memory_space<vmem>>, %arg19: memref<1x64xf32, #tpu.memory_space<vmem>>, %arg20: memref<64x128xf32, #tpu.memory_space<vmem>>, %arg21: memref<64x128xf32, #tpu.memory_space<vmem>>, %arg22: memref<8x128xf32, #tpu.memory_space<vmem>>, %arg23: memref<8x128xf32, #tpu.memory_space<vmem>>) attributes {dimension_semantics = [], scalar_prefetch = 0 : i64, scratch_operands = 0 : i64, tpu.core_type = #tpu.core_type<tc>} {
    %c0 = arith.constant 0 : index
    %c0_0 = arith.constant 0 : index
    %0 = vector.load %arg0[%c0, %c0_0] : memref<8x256xf32, #tpu.memory_space<vmem>>, vector<8x256xf32>
    %c0_1 = arith.constant 0 : index
    %c0_2 = arith.constant 0 : index
    %1 = vector.load %arg2[%c0_1, %c0_2] : memref<256x128xf32, #tpu.memory_space<vmem>>, vector<256x128xf32>
    %c0_3 = arith.constant 0 : index
    %c0_4 = arith.constant 0 : index
    %2 = vector.load %arg3[%c0_3, %c0_4] : memref<1x128xf32, #tpu.memory_space<vmem>>, vector<1x128xf32>
    %c0_5 = arith.constant 0 : index
    %c0_6 = arith.constant 0 : index
    %3 = vector.load %arg4[%c0_5, %c0_6] : memref<1x128xf32, #tpu.memory_space<vmem>>, vector<1x128xf32>
    %cst = arith.constant dense<0.000000e+00> : vector<8x128xf32>
    %4 = tpu.matmul %0, %1, %cst {dimension_numbers = #tpu.dot_dimension_numbers<[1], [0], [0], [1], [0, 0, 1, 1], [], []>} : vector<8x256xf32>, vector<256x128xf32>, vector<8x128xf32> -> vector<8x128xf32>
    %cst_7 = arith.constant dense<0.000000e+00> : vector<128xf32>
    %5 = vector.multi_reduction <add>, %4, %cst_7 [0] : vector<8x128xf32> to vector<128xf32>
    %6 = vector.shape_cast %5 : vector<128xf32> to vector<1x128xf32>
    %cst_8 = arith.constant 1.250000e-01 : f32
    %7 = vector.broadcast %cst_8 : f32 to vector<1x128xf32>
    %8 = arith.mulf %6, %7 : vector<1x128xf32>
    %9 = arith.mulf %4, %4 : vector<8x128xf32>
    %cst_9 = arith.constant dense<0.000000e+00> : vector<128xf32>
    %10 = vector.multi_reduction <add>, %9, %cst_9 [0] : vector<8x128xf32> to vector<128xf32>
    %11 = vector.shape_cast %10 : vector<128xf32> to vector<1x128xf32>
    %cst_10 = arith.constant 1.250000e-01 : f32
    %12 = vector.broadcast %cst_10 : f32 to vector<1x128xf32>
    %13 = arith.mulf %11, %12 : vector<1x128xf32>
    %14 = arith.mulf %8, %8 : vector<1x128xf32>
    %15 = arith.subf %13, %14 : vector<1x128xf32>
    %cst_11 = arith.constant 9.99999974E-6 : f32
    %16 = vector.broadcast %cst_11 : f32 to vector<1x128xf32>
    %17 = arith.addf %15, %16 : vector<1x128xf32>
    %18 = math.rsqrt %17 : vector<1x128xf32>
    %19 = arith.mulf %2, %18 : vector<1x128xf32>
    %20 = arith.mulf %8, %19 : vector<1x128xf32>
    %21 = arith.subf %3, %20 : vector<1x128xf32>
    %22 = vector.broadcast %19 : vector<1x128xf32> to vector<8x128xf32>
    %23 = arith.mulf %4, %22 : vector<8x128xf32>
    %24 = vector.broadcast %21 : vector<1x128xf32> to vector<8x128xf32>
    %25 = arith.addf %23, %24 : vector<8x128xf32>
    %cst_12 = arith.constant 0.000000e+00 : f32
    %26 = vector.broadcast %cst_12 : f32 to vector<8x128xf32>
    %27 = arith.maximumf %25, %26 : vector<8x128xf32>
    %c0_13 = arith.constant 0 : index
    %c0_14 = arith.constant 0 : index
    %28 = vector.load %arg5[%c0_13, %c0_14] : memref<128x128xf32, #tpu.memory_space<vmem>>, vector<128x128xf32>
    %c0_15 = arith.constant 0 : index
    %c0_16 = arith.constant 0 : index
    %29 = vector.load %arg6[%c0_15, %c0_16] : memref<1x128xf32, #tpu.memory_space<vmem>>, vector<1x128xf32>
    %c0_17 = arith.constant 0 : index
    %c0_18 = arith.constant 0 : index
    %30 = vector.load %arg7[%c0_17, %c0_18] : memref<1x128xf32, #tpu.memory_space<vmem>>, vector<1x128xf32>
    %cst_19 = arith.constant dense<0.000000e+00> : vector<8x128xf32>
    %31 = tpu.matmul %27, %28, %cst_19 {dimension_numbers = #tpu.dot_dimension_numbers<[1], [0], [0], [1], [0, 0, 1, 1], [], []>} : vector<8x128xf32>, vector<128x128xf32>, vector<8x128xf32> -> vector<8x128xf32>
    %cst_20 = arith.constant dense<0.000000e+00> : vector<128xf32>
    %32 = vector.multi_reduction <add>, %31, %cst_20 [0] : vector<8x128xf32> to vector<128xf32>
    %33 = vector.shape_cast %32 : vector<128xf32> to vector<1x128xf32>
    %cst_21 = arith.constant 1.250000e-01 : f32
    %34 = vector.broadcast %cst_21 : f32 to vector<1x128xf32>
    %35 = arith.mulf %33, %34 : vector<1x128xf32>
    %36 = arith.mulf %31, %31 : vector<8x128xf32>
    %cst_22 = arith.constant dense<0.000000e+00> : vector<128xf32>
    %37 = vector.multi_reduction <add>, %36, %cst_22 [0] : vector<8x128xf32> to vector<128xf32>
    %38 = vector.shape_cast %37 : vector<128xf32> to vector<1x128xf32>
    %cst_23 = arith.constant 1.250000e-01 : f32
    %39 = vector.broadcast %cst_23 : f32 to vector<1x128xf32>
    %40 = arith.mulf %38, %39 : vector<1x128xf32>
    %41 = arith.mulf %35, %35 : vector<1x128xf32>
    %42 = arith.subf %40, %41 : vector<1x128xf32>
    %cst_24 = arith.constant 9.99999974E-6 : f32
    %43 = vector.broadcast %cst_24 : f32 to vector<1x128xf32>
    %44 = arith.addf %42, %43 : vector<1x128xf32>
    %45 = math.rsqrt %44 : vector<1x128xf32>
    %46 = arith.mulf %29, %45 : vector<1x128xf32>
    %47 = arith.mulf %35, %46 : vector<1x128xf32>
    %48 = arith.subf %30, %47 : vector<1x128xf32>
    %49 = vector.broadcast %46 : vector<1x128xf32> to vector<8x128xf32>
    %50 = arith.mulf %31, %49 : vector<8x128xf32>
    %51 = vector.broadcast %48 : vector<1x128xf32> to vector<8x128xf32>
    %52 = arith.addf %50, %51 : vector<8x128xf32>
    %cst_25 = arith.constant 0.000000e+00 : f32
    %53 = vector.broadcast %cst_25 : f32 to vector<8x128xf32>
    %54 = arith.maximumf %52, %53 : vector<8x128xf32>
    %c0_26 = arith.constant 0 : index
    %c0_27 = arith.constant 0 : index
    %55 = vector.load %arg8[%c0_26, %c0_27] : memref<128x64xf32, #tpu.memory_space<vmem>>, vector<128x64xf32>
    %c0_28 = arith.constant 0 : index
    %c0_29 = arith.constant 0 : index
    %56 = vector.load %arg9[%c0_28, %c0_29] : memref<1x64xf32, #tpu.memory_space<vmem>>, vector<1x64xf32>
    %c0_30 = arith.constant 0 : index
    %c0_31 = arith.constant 0 : index
    %57 = vector.load %arg10[%c0_30, %c0_31] : memref<1x64xf32, #tpu.memory_space<vmem>>, vector<1x64xf32>
    %cst_32 = arith.constant dense<0.000000e+00> : vector<8x64xf32>
    %58 = tpu.matmul %54, %55, %cst_32 {dimension_numbers = #tpu.dot_dimension_numbers<[1], [0], [0], [1], [0, 0, 1, 1], [], []>} : vector<8x128xf32>, vector<128x64xf32>, vector<8x64xf32> -> vector<8x64xf32>
    %cst_33 = arith.constant dense<0.000000e+00> : vector<64xf32>
    %59 = vector.multi_reduction <add>, %58, %cst_33 [0] : vector<8x64xf32> to vector<64xf32>
    %60 = vector.shape_cast %59 : vector<64xf32> to vector<1x64xf32>
    %cst_34 = arith.constant 1.250000e-01 : f32
    %61 = vector.broadcast %cst_34 : f32 to vector<1x64xf32>
    %62 = arith.mulf %60, %61 : vector<1x64xf32>
    %63 = arith.mulf %58, %58 : vector<8x64xf32>
    %cst_35 = arith.constant dense<0.000000e+00> : vector<64xf32>
    %64 = vector.multi_reduction <add>, %63, %cst_35 [0] : vector<8x64xf32> to vector<64xf32>
    %65 = vector.shape_cast %64 : vector<64xf32> to vector<1x64xf32>
    %cst_36 = arith.constant 1.250000e-01 : f32
    %66 = vector.broadcast %cst_36 : f32 to vector<1x64xf32>
    %67 = arith.mulf %65, %66 : vector<1x64xf32>
    %68 = arith.mulf %62, %62 : vector<1x64xf32>
    %69 = arith.subf %67, %68 : vector<1x64xf32>
    %cst_37 = arith.constant 9.99999974E-6 : f32
    %70 = vector.broadcast %cst_37 : f32 to vector<1x64xf32>
    %71 = arith.addf %69, %70 : vector<1x64xf32>
    %72 = math.rsqrt %71 : vector<1x64xf32>
    %73 = arith.mulf %56, %72 : vector<1x64xf32>
    %74 = arith.mulf %62, %73 : vector<1x64xf32>
    %75 = arith.subf %57, %74 : vector<1x64xf32>
    %76 = vector.broadcast %73 : vector<1x64xf32> to vector<8x64xf32>
    %77 = arith.mulf %58, %76 : vector<8x64xf32>
    %78 = vector.broadcast %75 : vector<1x64xf32> to vector<8x64xf32>
    %79 = arith.addf %77, %78 : vector<8x64xf32>
    %cst_38 = arith.constant 0.000000e+00 : f32
    %80 = vector.broadcast %cst_38 : f32 to vector<8x64xf32>
    %81 = arith.maximumf %79, %80 : vector<8x64xf32>
    %c0_39 = arith.constant 0 : index
    %c0_40 = arith.constant 0 : index
    %82 = vector.load %arg1[%c0_39, %c0_40] : memref<8x128xf32, #tpu.memory_space<vmem>>, vector<8x128xf32>
    %c0_41 = arith.constant 0 : index
    %c0_42 = arith.constant 0 : index
    %83 = vector.load %arg11[%c0_41, %c0_42] : memref<128x128xf32, #tpu.memory_space<vmem>>, vector<128x128xf32>
    %c0_43 = arith.constant 0 : index
    %c0_44 = arith.constant 0 : index
    %84 = vector.load %arg12[%c0_43, %c0_44] : memref<1x128xf32, #tpu.memory_space<vmem>>, vector<1x128xf32>
    %c0_45 = arith.constant 0 : index
    %c0_46 = arith.constant 0 : index
    %85 = vector.load %arg13[%c0_45, %c0_46] : memref<1x128xf32, #tpu.memory_space<vmem>>, vector<1x128xf32>
    %cst_47 = arith.constant dense<0.000000e+00> : vector<8x128xf32>
    %86 = tpu.matmul %82, %83, %cst_47 {dimension_numbers = #tpu.dot_dimension_numbers<[1], [0], [0], [1], [0, 0, 1, 1], [], []>} : vector<8x128xf32>, vector<128x128xf32>, vector<8x128xf32> -> vector<8x128xf32>
    %cst_48 = arith.constant dense<0.000000e+00> : vector<128xf32>
    %87 = vector.multi_reduction <add>, %86, %cst_48 [0] : vector<8x128xf32> to vector<128xf32>
    %88 = vector.shape_cast %87 : vector<128xf32> to vector<1x128xf32>
    %cst_49 = arith.constant 1.250000e-01 : f32
    %89 = vector.broadcast %cst_49 : f32 to vector<1x128xf32>
    %90 = arith.mulf %88, %89 : vector<1x128xf32>
    %91 = arith.mulf %86, %86 : vector<8x128xf32>
    %cst_50 = arith.constant dense<0.000000e+00> : vector<128xf32>
    %92 = vector.multi_reduction <add>, %91, %cst_50 [0] : vector<8x128xf32> to vector<128xf32>
    %93 = vector.shape_cast %92 : vector<128xf32> to vector<1x128xf32>
    %cst_51 = arith.constant 1.250000e-01 : f32
    %94 = vector.broadcast %cst_51 : f32 to vector<1x128xf32>
    %95 = arith.mulf %93, %94 : vector<1x128xf32>
    %96 = arith.mulf %90, %90 : vector<1x128xf32>
    %97 = arith.subf %95, %96 : vector<1x128xf32>
    %cst_52 = arith.constant 9.99999974E-6 : f32
    %98 = vector.broadcast %cst_52 : f32 to vector<1x128xf32>
    %99 = arith.addf %97, %98 : vector<1x128xf32>
    %100 = math.rsqrt %99 : vector<1x128xf32>
    %101 = arith.mulf %84, %100 : vector<1x128xf32>
    %102 = arith.mulf %90, %101 : vector<1x128xf32>
    %103 = arith.subf %85, %102 : vector<1x128xf32>
    %104 = vector.broadcast %101 : vector<1x128xf32> to vector<8x128xf32>
    %105 = arith.mulf %86, %104 : vector<8x128xf32>
    %106 = vector.broadcast %103 : vector<1x128xf32> to vector<8x128xf32>
    %107 = arith.addf %105, %106 : vector<8x128xf32>
    %cst_53 = arith.constant 0.000000e+00 : f32
    %108 = vector.broadcast %cst_53 : f32 to vector<8x128xf32>
    %109 = arith.maximumf %107, %108 : vector<8x128xf32>
    %c0_54 = arith.constant 0 : index
    %c0_55 = arith.constant 0 : index
    %110 = vector.load %arg14[%c0_54, %c0_55] : memref<128x128xf32, #tpu.memory_space<vmem>>, vector<128x128xf32>
    %c0_56 = arith.constant 0 : index
    %c0_57 = arith.constant 0 : index
    %111 = vector.load %arg15[%c0_56, %c0_57] : memref<1x128xf32, #tpu.memory_space<vmem>>, vector<1x128xf32>
    %c0_58 = arith.constant 0 : index
    %c0_59 = arith.constant 0 : index
    %112 = vector.load %arg16[%c0_58, %c0_59] : memref<1x128xf32, #tpu.memory_space<vmem>>, vector<1x128xf32>
    %cst_60 = arith.constant dense<0.000000e+00> : vector<8x128xf32>
    %113 = tpu.matmul %109, %110, %cst_60 {dimension_numbers = #tpu.dot_dimension_numbers<[1], [0], [0], [1], [0, 0, 1, 1], [], []>} : vector<8x128xf32>, vector<128x128xf32>, vector<8x128xf32> -> vector<8x128xf32>
    %cst_61 = arith.constant dense<0.000000e+00> : vector<128xf32>
    %114 = vector.multi_reduction <add>, %113, %cst_61 [0] : vector<8x128xf32> to vector<128xf32>
    %115 = vector.shape_cast %114 : vector<128xf32> to vector<1x128xf32>
    %cst_62 = arith.constant 1.250000e-01 : f32
    %116 = vector.broadcast %cst_62 : f32 to vector<1x128xf32>
    %117 = arith.mulf %115, %116 : vector<1x128xf32>
    %118 = arith.mulf %113, %113 : vector<8x128xf32>
    %cst_63 = arith.constant dense<0.000000e+00> : vector<128xf32>
    %119 = vector.multi_reduction <add>, %118, %cst_63 [0] : vector<8x128xf32> to vector<128xf32>
    %120 = vector.shape_cast %119 : vector<128xf32> to vector<1x128xf32>
    %cst_64 = arith.constant 1.250000e-01 : f32
    %121 = vector.broadcast %cst_64 : f32 to vector<1x128xf32>
    %122 = arith.mulf %120, %121 : vector<1x128xf32>
    %123 = arith.mulf %117, %117 : vector<1x128xf32>
    %124 = arith.subf %122, %123 : vector<1x128xf32>
    %cst_65 = arith.constant 9.99999974E-6 : f32
    %125 = vector.broadcast %cst_65 : f32 to vector<1x128xf32>
    %126 = arith.addf %124, %125 : vector<1x128xf32>
    %127 = math.rsqrt %126 : vector<1x128xf32>
    %128 = arith.mulf %111, %127 : vector<1x128xf32>
    %129 = arith.mulf %117, %128 : vector<1x128xf32>
    %130 = arith.subf %112, %129 : vector<1x128xf32>
    %131 = vector.broadcast %128 : vector<1x128xf32> to vector<8x128xf32>
    %132 = arith.mulf %113, %131 : vector<8x128xf32>
    %133 = vector.broadcast %130 : vector<1x128xf32> to vector<8x128xf32>
    %134 = arith.addf %132, %133 : vector<8x128xf32>
    %cst_66 = arith.constant 0.000000e+00 : f32
    %135 = vector.broadcast %cst_66 : f32 to vector<8x128xf32>
    %136 = arith.maximumf %134, %135 : vector<8x128xf32>
    %c0_67 = arith.constant 0 : index
    %c0_68 = arith.constant 0 : index
    %137 = vector.load %arg17[%c0_67, %c0_68] : memref<128x64xf32, #tpu.memory_space<vmem>>, vector<128x64xf32>
    %c0_69 = arith.constant 0 : index
    %c0_70 = arith.constant 0 : index
    %138 = vector.load %arg18[%c0_69, %c0_70] : memref<1x64xf32, #tpu.memory_space<vmem>>, vector<1x64xf32>
    %c0_71 = arith.constant 0 : index
    %c0_72 = arith.constant 0 : index
    %139 = vector.load %arg19[%c0_71, %c0_72] : memref<1x64xf32, #tpu.memory_space<vmem>>, vector<1x64xf32>
    %cst_73 = arith.constant dense<0.000000e+00> : vector<8x64xf32>
    %140 = tpu.matmul %136, %137, %cst_73 {dimension_numbers = #tpu.dot_dimension_numbers<[1], [0], [0], [1], [0, 0, 1, 1], [], []>} : vector<8x128xf32>, vector<128x64xf32>, vector<8x64xf32> -> vector<8x64xf32>
    %cst_74 = arith.constant dense<0.000000e+00> : vector<64xf32>
    %141 = vector.multi_reduction <add>, %140, %cst_74 [0] : vector<8x64xf32> to vector<64xf32>
    %142 = vector.shape_cast %141 : vector<64xf32> to vector<1x64xf32>
    %cst_75 = arith.constant 1.250000e-01 : f32
    %143 = vector.broadcast %cst_75 : f32 to vector<1x64xf32>
    %144 = arith.mulf %142, %143 : vector<1x64xf32>
    %145 = arith.mulf %140, %140 : vector<8x64xf32>
    %cst_76 = arith.constant dense<0.000000e+00> : vector<64xf32>
    %146 = vector.multi_reduction <add>, %145, %cst_76 [0] : vector<8x64xf32> to vector<64xf32>
    %147 = vector.shape_cast %146 : vector<64xf32> to vector<1x64xf32>
    %cst_77 = arith.constant 1.250000e-01 : f32
    %148 = vector.broadcast %cst_77 : f32 to vector<1x64xf32>
    %149 = arith.mulf %147, %148 : vector<1x64xf32>
    %150 = arith.mulf %144, %144 : vector<1x64xf32>
    %151 = arith.subf %149, %150 : vector<1x64xf32>
    %cst_78 = arith.constant 9.99999974E-6 : f32
    %152 = vector.broadcast %cst_78 : f32 to vector<1x64xf32>
    %153 = arith.addf %151, %152 : vector<1x64xf32>
    %154 = math.rsqrt %153 : vector<1x64xf32>
    %155 = arith.mulf %138, %154 : vector<1x64xf32>
    %156 = arith.mulf %144, %155 : vector<1x64xf32>
    %157 = arith.subf %139, %156 : vector<1x64xf32>
    %158 = vector.broadcast %155 : vector<1x64xf32> to vector<8x64xf32>
    %159 = arith.mulf %140, %158 : vector<8x64xf32>
    %160 = vector.broadcast %157 : vector<1x64xf32> to vector<8x64xf32>
    %161 = arith.addf %159, %160 : vector<8x64xf32>
    %cst_79 = arith.constant 0.000000e+00 : f32
    %162 = vector.broadcast %cst_79 : f32 to vector<8x64xf32>
    %163 = arith.maximumf %161, %162 : vector<8x64xf32>
    %c0_80 = arith.constant 0 : index
    %c0_81 = arith.constant 0 : index
    %164 = vector.load %arg20[%c0_80, %c0_81] : memref<64x128xf32, #tpu.memory_space<vmem>>, vector<64x128xf32>
    %cst_82 = arith.constant dense<0.000000e+00> : vector<8x128xf32>
    %165 = tpu.matmul %81, %164, %cst_82 {dimension_numbers = #tpu.dot_dimension_numbers<[1], [0], [0], [1], [0, 0, 1, 1], [], []>} : vector<8x64xf32>, vector<64x128xf32>, vector<8x128xf32> -> vector<8x128xf32>
    %c0_83 = arith.constant 0 : index
    %c0_84 = arith.constant 0 : index
    %166 = vector.load %arg22[%c0_83, %c0_84] : memref<8x128xf32, #tpu.memory_space<vmem>>, vector<8x128xf32>
    tpu.vector_store %arg22[%c0_83, %c0_84], %165 {strides = array<i32>} : memref<8x128xf32, #tpu.memory_space<vmem>>, vector<8x128xf32>,
    %c0_85 = arith.constant 0 : index
    %c0_86 = arith.constant 0 : index
    %167 = vector.load %arg21[%c0_85, %c0_86] : memref<64x128xf32, #tpu.memory_space<vmem>>, vector<64x128xf32>
    %cst_87 = arith.constant dense<0.000000e+00> : vector<8x128xf32>
    %168 = tpu.matmul %163, %167, %cst_87 {dimension_numbers = #tpu.dot_dimension_numbers<[1], [0], [0], [1], [0, 0, 1, 1], [], []>} : vector<8x64xf32>, vector<64x128xf32>, vector<8x128xf32> -> vector<8x128xf32>
    %c0_88 = arith.constant 0 : index
    %c0_89 = arith.constant 0 : index
    %169 = vector.load %arg23[%c0_88, %c0_89] : memref<8x128xf32, #tpu.memory_space<vmem>>, vector<8x128xf32>
    tpu.vector_store %arg23[%c0_88, %c0_89], %168 {strides = array<i32>} : memref<8x128xf32, #tpu.memory_space<vmem>>, vector<8x128xf32>,
    return
  }
}

</mosaic_0001>

<llo_original>
// kernel: tpu_custom_call.1
$region0: #{tpu_custom_call.1}
  #allocation0 [shape = 'u32[]', space=smem, size = 0x4, offset = 0x4, fixed_abs, tag = 'smem constant byte address 0x4 - core index']
  #allocation1 [shape = 'u32[144,128]{1,0:T(1,128)}', space=vmem, size = 0x12000, scoped, tag = 'internal scratch']
  %s0 = inlined_call_operand.hbm [shape: f32[8,256], index: 0, kind: input, shape index: {}]
  %s1 = inlined_call_operand.hbm [shape: f32[8,128], index: 1, kind: input, shape index: {}]
  %s2 = inlined_call_operand.vmem [shape: f32[256,128], index: 2, kind: input, shape index: {}]
  %s3 = inlined_call_operand.vmem [shape: f32[1,128], index: 3, kind: input, shape index: {}]
  %s4 = inlined_call_operand.vmem [shape: f32[1,128], index: 4, kind: input, shape index: {}]
  %s5 = inlined_call_operand.vmem [shape: f32[128,128], index: 5, kind: input, shape index: {}]
  %s6 = inlined_call_operand.vmem [shape: f32[1,128], index: 6, kind: input, shape index: {}]
  %s7 = inlined_call_operand.vmem [shape: f32[1,128], index: 7, kind: input, shape index: {}]
  %s8 = inlined_call_operand.vmem [shape: f32[128,64], index: 8, kind: input, shape index: {}]
  %s9 = inlined_call_operand.vmem [shape: f32[1,64], index: 9, kind: input, shape index: {}]
  %s10 = inlined_call_operand.vmem [shape: f32[1,64], index: 10, kind: input, shape index: {}]
  %s11 = inlined_call_operand.hbm [shape: f32[128,128], index: 11, kind: input, shape index: {}]
  %s12 = inlined_call_operand.vmem [shape: f32[1,128], index: 12, kind: input, shape index: {}]
  %s13 = inlined_call_operand.vmem [shape: f32[1,128], index: 13, kind: input, shape index: {}]
  %s14 = inlined_call_operand.hbm [shape: f32[128,128], index: 14, kind: input, shape index: {}]
  %s15 = inlined_call_operand.vmem [shape: f32[1,128], index: 15, kind: input, shape index: {}]
  %s16 = inlined_call_operand.vmem [shape: f32[1,128], index: 16, kind: input, shape index: {}]
  %s17 = inlined_call_operand.vmem [shape: f32[128,64], index: 17, kind: input, shape index: {}]
  %s18 = inlined_call_operand.vmem [shape: f32[1,64], index: 18, kind: input, shape index: {}]
  %s19 = inlined_call_operand.vmem [shape: f32[1,64], index: 19, kind: input, shape index: {}]
  %s20 = inlined_call_operand.hbm [shape: f32[64,128], index: 20, kind: input, shape index: {}]
  %s21 = inlined_call_operand.hbm [shape: f32[64,128], index: 21, kind: input, shape index: {}]
  %s22 = inlined_call_operand.hbm [shape: f32[8,128], index: 22, kind: output, shape index: {0}]
  %s23 = inlined_call_operand.hbm [shape: f32[8,128], index: 23, kind: output, shape index: {1}]
  %24 = xla_tuple %s22, %s23
  %s25 = sld [smem:[#allocation0]]
  $region130: #{tpu_custom_call.1} parent=0
    _
  %s27 = ssub.s32 1, %s25
  %s28 = scalar_select 0, %s27, %s25
  $region1: #{tpu_custom_call.1} parent=0
    #allocation2 [shape = 'u8[8192]{0}', space=vmem, size = 0x2000, scoped, tag = 'input window, operand 0, single buffered']
    #allocation3 [shape = 's32[1]{0}', space=sflag, size = 0x4, scoped, tag = 'scoped memory for tpu_custom_call.1']
    #allocation4 [shape = 's32[1]{0}', space=sflag, size = 0x4, scoped, tag = 'scoped memory for tpu_custom_call.1']
    #allocation5 [shape = 'u8[4096]{0}', space=vmem, size = 0x1000, scoped, tag = 'input window, operand 1, single buffered']
    #allocation6 [shape = 's32[1]{0}', space=sflag, size = 0x4, scoped, tag = 'scoped memory for tpu_custom_call.1']
    #allocation7 [shape = 'u8[65536]{0}', space=vmem, size = 0x10000, scoped, tag = 'input window, operand 11, single buffered']
    #allocation8 [shape = 'u8[65536]{0}', space=vmem, size = 0x10000, scoped, tag = 'input window, operand 14, single buffered']
    #allocation9 [shape = 's32[1]{0}', space=sflag, size = 0x4, scoped, tag = 'scoped memory for tpu_custom_call.1']
    #allocation10 [shape = 'u8[32768]{0}', space=vmem, size = 0x8000, scoped, tag = 'input window, operand 20, single buffered']
    #allocation11 [shape = 'u8[32768]{0}', space=vmem, size = 0x8000, scoped, tag = 'input window, operand 21, single buffered']
    #allocation12 [shape = 's32[1]{0}', space=sflag, size = 0x4, scoped, tag = 'scoped memory for tpu_custom_call.1']
    #allocation13 [shape = 'u8[4096]{0}', space=vmem, size = 0x1000, scoped, tag = 'output window, operand 0, single buffered']
    #allocation14 [shape = 'u8[4096]{0}', space=vmem, size = 0x1000, scoped, tag = 'output window, operand 1, single buffered']
    #allocation15 [shape = 's32[1]{0}', space=sflag, size = 0x4, scoped, tag = 'scoped memory for tpu_custom_call.1']
    %29 = vsyncpa [#allocation3], 0
    %30 = vsyncpa [#allocation6], 0
    %31 = vsyncpa [#allocation9], 0
    %32 = vsyncpa [#allocation12], 0
    %33 = vsyncpa [#allocation4], 0
    %34 = vsyncpa [#allocation15], 0
    // Predicated region
    $region2: #{tpu_custom_call.1} parent=1 // pred_check
      _
    $region3: #{tpu_custom_call.1} parent=1 // pred_check_branch
      %36 = sbr.rel (0) target = $region5
    $region4: #{tpu_custom_call.1} parent=1 // pred_region
      %s38 = ssub.s32 256, 256
      %39 = vsyncadd [#allocation3], %s38
      %s41 = sshll.u32 [#allocation2], 4
      %s42 = int_to_ptr.vmem [resolvable:$true] %s41
      %44 = dma.hbm_to_vmem [thread:$0]  %s0, 256, %s42, [#allocation3]
    $region5: #{tpu_custom_call.1} parent=1 // pred_fallthru
      _
    // Predicated region
    $region6: #{tpu_custom_call.1} parent=1 // pred_check
      _
    $region7: #{tpu_custom_call.1} parent=1 // pred_check_branch
      %46 = sbr.rel (0) target = $region9
    $region8: #{tpu_custom_call.1} parent=1 // pred_region
      %s48 = ssub.s32 128, 128
      %49 = vsyncadd [#allocation6], %s48
      %s51 = sshll.u32 [#allocation5], 4
      %s52 = int_to_ptr.vmem [resolvable:$true] %s51
      %54 = dma.hbm_to_vmem [thread:$0]  %s1, 128, %s52, [#allocation6]
    $region9: #{tpu_custom_call.1} parent=1 // pred_fallthru
      _
    // Predicated region
    $region10: #{tpu_custom_call.1} parent=1 // pred_check
      _
    $region11: #{tpu_custom_call.1} parent=1 // pred_check_branch
      %56 = sbr.rel (0) target = $region13
    $region12: #{tpu_custom_call.1} parent=1 // pred_region
      _
    $region13: #{tpu_custom_call.1} parent=1 // pred_fallthru
      _
    // Predicated region
    $region14: #{tpu_custom_call.1} parent=1 // pred_check
      _
    $region15: #{tpu_custom_call.1} parent=1 // pred_check_branch
      %58 = sbr.rel (0) target = $region17
    $region16: #{tpu_custom_call.1} parent=1 // pred_region
      _
    $region17: #{tpu_custom_call.1} parent=1 // pred_fallthru
      _
    // Predicated region
    $region18: #{tpu_custom_call.1} parent=1 // pred_check
      _
    $region19: #{tpu_custom_call.1} parent=1 // pred_check_branch
      %60 = sbr.rel (0) target = $region21
    $region20: #{tpu_custom_call.1} parent=1 // pred_region
      _
    $region21: #{tpu_custom_call.1} parent=1 // pred_fallthru
      _
    // Predicated region
    $region22: #{tpu_custom_call.1} parent=1 // pred_check
      _
    $region23: #{tpu_custom_call.1} parent=1 // pred_check_branch
      %62 = sbr.rel (0) target = $region25
    $region24: #{tpu_custom_call.1} parent=1 // pred_region
      _
    $region25: #{tpu_custom_call.1} parent=1 // pred_fallthru
      _
    // Predicated region
    $region26: #{tpu_custom_call.1} parent=1 // pred_check
      _
    $region27: #{tpu_custom_call.1} parent=1 // pred_check_branch
      %64 = sbr.rel (0) target = $region29
    $region28: #{tpu_custom_call.1} parent=1 // pred_region
      _
    $region29: #{tpu_custom_call.1} parent=1 // pred_fallthru
      _
    // Predicated region
    $region30: #{tpu_custom_call.1} parent=1 // pred_check
      _
    $region31: #{tpu_custom_call.1} parent=1 // pred_check_branch
      %66 = sbr.rel (0) target = $region33
    $region32: #{tpu_custom_call.1} parent=1 // pred_region
      _
    $region33: #{tpu_custom_call.1} parent=1 // pred_fallthru
      _
    // Predicated region
    $region34: #{tpu_custom_call.1} parent=1 // pred_check
      _
    $region35: #{tpu_custom_call.1} parent=1 // pred_check_branch
      %68 = sbr.rel (0) target = $region37
    $region36: #{tpu_custom_call.1} parent=1 // pred_region
      _
    $region37: #{tpu_custom_call.1} parent=1 // pred_fallthru
      _
    // Predicated region
    $region38: #{tpu_custom_call.1} parent=1 // pred_check
      _
    $region39: #{tpu_custom_call.1} parent=1 // pred_check_branch
      %70 = sbr.rel (0) target = $region41
    $region40: #{tpu_custom_call.1} parent=1 // pred_region
      _
    $region41: #{tpu_custom_call.1} parent=1 // pred_fallthru
      _
    // Predicated region
    $region42: #{tpu_custom_call.1} parent=1 // pred_check
      _
    $region43: #{tpu_custom_call.1} parent=1 // pred_check_branch
      %72 = sbr.rel (0) target = $region45
    $region44: #{tpu_custom_call.1} parent=1 // pred_region
      _
    $region45: #{tpu_custom_call.1} parent=1 // pred_fallthru
      _
    // Predicated region
    $region46: #{tpu_custom_call.1} parent=1 // pred_check
      _
    $region47: #{tpu_custom_call.1} parent=1 // pred_check_branch
      %74 = sbr.rel (0) target = $region49
    $region48: #{tpu_custom_call.1} parent=1 // pred_region
      %s76 = ssub.s32 2048, 2048
      %77 = vsyncadd [#allocation6], %s76
      %s78 = sshll.u32 [#allocation7], 4
      %s79 = int_to_ptr.vmem [resolvable:$true] %s78
      %84 = dma.hbm_to_vmem [thread:$0]  %s11, 2048, %s79, [#allocation6], 128, 128, 8
    $region49: #{tpu_custom_call.1} parent=1 // pred_fallthru
      _
    // Predicated region
    $region50: #{tpu_custom_call.1} parent=1 // pred_check
      _
    $region51: #{tpu_custom_call.1} parent=1 // pred_check_branch
      %86 = sbr.rel (0) target = $region53
    $region52: #{tpu_custom_call.1} parent=1 // pred_region
      _
    $region53: #{tpu_custom_call.1} parent=1 // pred_fallthru
      _
    // Predicated region
    $region54: #{tpu_custom_call.1} parent=1 // pred_check
      _
    $region55: #{tpu_custom_call.1} parent=1 // pred_check_branch
      %88 = sbr.rel (0) target = $region57
    $region56: #{tpu_custom_call.1} parent=1 // pred_region
      _
    $region57: #{tpu_custom_call.1} parent=1 // pred_fallthru
      _
    // Predicated region
    $region58: #{tpu_custom_call.1} parent=1 // pred_check
      _
    $region59: #{tpu_custom_call.1} parent=1 // pred_check_branch
      %90 = sbr.rel (0) target = $region61
    $region60: #{tpu_custom_call.1} parent=1 // pred_region
      %s92 = ssub.s32 2048, 2048
      %93 = vsyncadd [#allocation9], %s92
      %s94 = sshll.u32 [#allocation8], 4
      %s95 = int_to_ptr.vmem [resolvable:$true] %s94
      %100 = dma.hbm_to_vmem [thread:$0]  %s14, 2048, %s95, [#allocation9], 128, 128, 8
    $region61: #{tpu_custom_call.1} parent=1 // pred_fallthru
      _
    // Predicated region
    $region62: #{tpu_custom_call.1} parent=1 // pred_check
      _
    $region63: #{tpu_custom_call.1} parent=1 // pred_check_branch
      %102 = sbr.rel (0) target = $region65
    $region64: #{tpu_custom_call.1} parent=1 // pred_region
      _
    $region65: #{tpu_custom_call.1} parent=1 // pred_fallthru
      _
    // Predicated region
    $region66: #{tpu_custom_call.1} parent=1 // pred_check
      _
    $region67: #{tpu_custom_call.1} parent=1 // pred_check_branch
      %104 = sbr.rel (0) target = $region69
    $region68: #{tpu_custom_call.1} parent=1 // pred_region
      _
    $region69: #{tpu_custom_call.1} parent=1 // pred_fallthru
      _
    // Predicated region
    $region70: #{tpu_custom_call.1} parent=1 // pred_check
      _
    $region71: #{tpu_custom_call.1} parent=1 // pred_check_branch
      %106 = sbr.rel (0) target = $region73
    $region72: #{tpu_custom_call.1} parent=1 // pred_region
      _
    $region73: #{tpu_custom_call.1} parent=1 // pred_fallthru
      _
    // Predicated region
    $region74: #{tpu_custom_call.1} parent=1 // pred_check
      _
    $region75: #{tpu_custom_call.1} parent=1 // pred_check_branch
      %108 = sbr.rel (0) target = $region77
    $region76: #{tpu_custom_call.1} parent=1 // pred_region
      _
    $region77: #{tpu_custom_call.1} parent=1 // pred_fallthru
      _
    // Predicated region
    $region78: #{tpu_custom_call.1} parent=1 // pred_check
      _
    $region79: #{tpu_custom_call.1} parent=1 // pred_check_branch
      %110 = sbr.rel (0) target = $region81
    $region80: #{tpu_custom_call.1} parent=1 // pred_region
      _
    $region81: #{tpu_custom_call.1} parent=1 // pred_fallthru
      _
    // Predicated region
    $region82: #{tpu_custom_call.1} parent=1 // pred_check
      _
    $region83: #{tpu_custom_call.1} parent=1 // pred_check_branch
      %112 = sbr.rel (0) target = $region85
    $region84: #{tpu_custom_call.1} parent=1 // pred_region
      %s114 = ssub.s32 1024, 1024
      %115 = vsyncadd [#allocation9], %s114
      %s116 = sshll.u32 [#allocation10], 4
      %s117 = int_to_ptr.vmem [resolvable:$true] %s116
      %122 = dma.hbm_to_vmem [thread:$0]  %s20, 1024, %s117, [#allocation9], 128, 128, 8
    $region85: #{tpu_custom_call.1} parent=1 // pred_fallthru
      _
    // Predicated region
    $region86: #{tpu_custom_call.1} parent=1 // pred_check
      _
    $region87: #{tpu_custom_call.1} parent=1 // pred_check_branch
      %124 = sbr.rel (0) target = $region89
    $region88: #{tpu_custom_call.1} parent=1 // pred_region
      %s126 = ssub.s32 1024, 1024
      %127 = vsyncadd [#allocation12], %s126
      %s128 = sshll.u32 [#allocation11], 4
      %s129 = int_to_ptr.vmem [resolvable:$true] %s128
      %134 = dma.hbm_to_vmem [thread:$0]  %s21, 1024, %s129, [#allocation12], 128, 128, 8
    $region89: #{tpu_custom_call.1} parent=1 // pred_fallthru
      _
    // Predicated region
    $region90: #{tpu_custom_call.1} parent=1 // pred_check
      _
    $region91: #{tpu_custom_call.1} parent=1 // pred_check_branch
      %136 = sbr.rel (0) target = $region93
    $region92: #{tpu_custom_call.1} parent=1 // pred_region
      %137 = dma.done [#allocation3], 256
    $region93: #{tpu_custom_call.1} parent=1 // pred_fallthru
      _
    // Predicated region
    $region94: #{tpu_custom_call.1} parent=1 // pred_check
      _
    $region95: #{tpu_custom_call.1} parent=1 // pred_check_branch
      %139 = sbr.rel (0) target = $region97
    $region96: #{tpu_custom_call.1} parent=1 // pred_region
      %140 = dma.done [#allocation6], 128
    $region97: #{tpu_custom_call.1} parent=1 // pred_fallthru
      _
    // Predicated region
    $region98: #{tpu_custom_call.1} parent=1 // pred_check
      _
    $region99: #{tpu_custom_call.1} parent=1 // pred_check_branch
      %142 = sbr.rel (0) target = $region101
    $region100: #{tpu_custom_call.1} parent=1 // pred_region
      %143 = dma.done [#allocation6], 2048
    $region101: #{tpu_custom_call.1} parent=1 // pred_fallthru
      _
    // Predicated region
    $region102: #{tpu_custom_call.1} parent=1 // pred_check
      _
    $region103: #{tpu_custom_call.1} parent=1 // pred_check_branch
      %145 = sbr.rel (0) target = $region105
    $region104: #{tpu_custom_call.1} parent=1 // pred_region
      %146 = dma.done [#allocation9], 2048
    $region105: #{tpu_custom_call.1} parent=1 // pred_fallthru
      _
    // Predicated region
    $region106: #{tpu_custom_call.1} parent=1 // pred_check
      _
    $region107: #{tpu_custom_call.1} parent=1 // pred_check_branch
      %148 = sbr.rel (0) target = $region109
    $region108: #{tpu_custom_call.1} parent=1 // pred_region
      %149 = dma.done [#allocation9], 1024
    $region109: #{tpu_custom_call.1} parent=1 // pred_fallthru
      _
    // Predicated region
    $region110: #{tpu_custom_call.1} parent=1 // pred_check
      _
    $region111: #{tpu_custom_call.1} parent=1 // pred_check_branch
      %151 = sbr.rel (0) target = $region113
    $region112: #{tpu_custom_call.1} parent=1 // pred_region
      %152 = dma.done [#allocation12], 1024
    $region113: #{tpu_custom_call.1} parent=1 // pred_fallthru
      _
    %v153 = vld [vmem:[#allocation2] sm:$0xff]
    %v154 = vld [vmem:[#allocation2 + $0x8] sm:$0xff]
    %v155 = vld [vmem:[%s2] sm:$0xff]
    %v156 = vld [vmem:[%s2 + $0x8] sm:$0xff]
    %v157 = vld [vmem:[%s2 + $0x10] sm:$0xff]
    %v158 = vld [vmem:[%s2 + $0x18] sm:$0xff]
    %v159 = vld [vmem:[%s2 + $0x20] sm:$0xff]
    %v160 = vld [vmem:[%s2 + $0x28] sm:$0xff]
    %v161 = vld [vmem:[%s2 + $0x30] sm:$0xff]
    %v162 = vld [vmem:[%s2 + $0x38] sm:$0xff]
    %v163 = vld [vmem:[%s2 + $0x40] sm:$0xff]
    %v164 = vld [vmem:[%s2 + $0x48] sm:$0xff]
    %v165 = vld [vmem:[%s2 + $0x50] sm:$0xff]
    %v166 = vld [vmem:[%s2 + $0x58] sm:$0xff]
    %v167 = vld [vmem:[%s2 + $0x60] sm:$0xff]
    %v168 = vld [vmem:[%s2 + $0x68] sm:$0xff]
    %v169 = vld [vmem:[%s2 + $0x70] sm:$0xff]
    %v170 = vld [vmem:[%s2 + $0x78] sm:$0xff]
    %v171 = vld [vmem:[%s2 + $0x80] sm:$0xff]
    %v172 = vld [vmem:[%s2 + $0x88] sm:$0xff]
    %v173 = vld [vmem:[%s2 + $0x90] sm:$0xff]
    %v174 = vld [vmem:[%s2 + $0x98] sm:$0xff]
    %v175 = vld [vmem:[%s2 + $0xa0] sm:$0xff]
    %v176 = vld [vmem:[%s2 + $0xa8] sm:$0xff]
    %v177 = vld [vmem:[%s2 + $0xb0] sm:$0xff]
    %v178 = vld [vmem:[%s2 + $0xb8] sm:$0xff]
    %v179 = vld [vmem:[%s2 + $0xc0] sm:$0xff]
    %v180 = vld [vmem:[%s2 + $0xc8] sm:$0xff]
    %v181 = vld [vmem:[%s2 + $0xd0] sm:$0xff]
    %v182 = vld [vmem:[%s2 + $0xd8] sm:$0xff]
    %v183 = vld [vmem:[%s2 + $0xe0] sm:$0xff]
    %v184 = vld [vmem:[%s2 + $0xe8] sm:$0xff]
    %v185 = vld [vmem:[%s2 + $0xf0] sm:$0xff]
    %v186 = vld [vmem:[%s2 + $0xf8] sm:$0xff]
    %v187 = vld [vmem:[%s3] sm:$0x1]
    %v188 = vld [vmem:[%s4] sm:$0x1]
    %189 = vmatprep.subr.mxu0 0.0
    %190 = vmatpush1.msra.mxu0 %v170
    %191 = vmatprep.subr.mxu0 0.0
    %192 = vmatpush1.msra.mxu0 %v169
    %193 = vmatprep.subr.mxu0 0.0
    %194 = vmatpush1.msra.mxu0 %v168
    %195 = vmatprep.subr.mxu0 0.0
    %196 = vmatpush1.msra.mxu0 %v167
    %197 = vmatprep.subr.mxu0 0.0
    %198 = vmatpush1.msra.mxu0 %v166
    %199 = vmatprep.subr.mxu0 0.0
    %200 = vmatpush1.msra.mxu0 %v165
    %201 = vmatprep.subr.mxu0 0.0
    %202 = vmatpush1.msra.mxu0 %v164
    %203 = vmatprep.subr.mxu0 0.0
    %204 = vmatpush1.msra.mxu0 %v163
    %205 = vmatprep.subr.mxu0 0.0
    %206 = vmatpush1.msra.mxu0 %v162
    %207 = vmatprep.subr.mxu0 0.0
    %208 = vmatpush1.msra.mxu0 %v161
    %209 = vmatprep.subr.mxu0 0.0
    %210 = vmatpush1.msra.mxu0 %v160
    %211 = vmatprep.subr.mxu0 0.0
    %212 = vmatpush1.msra.mxu0 %v159
    %213 = vmatprep.subr.mxu0 0.0
    %214 = vmatpush1.msra.mxu0 %v158
    %215 = vmatprep.subr.mxu0 0.0
    %216 = vmatpush1.msra.mxu0 %v157
    %217 = vmatprep.subr.mxu0 0.0
    %218 = vmatpush1.msra.mxu0 %v156
    %219 = vmatprep.subr.mxu0 0.0
    %220 = vmatpush1.msra.mxu0 %v155
    %221 = vmatprep.subr.mxu0 0.0
    %222 = vmatpush2.msra.mxu0 %v186
    %223 = vmatprep.subr.mxu0 0.0
    %224 = vmatpush2.msra.mxu0 %v185
    %225 = vmatprep.subr.mxu0 0.0
    %226 = vmatpush2.msra.mxu0 %v184
    %227 = vmatprep.subr.mxu0 0.0
    %228 = vmatpush2.msra.mxu0 %v183
    %229 = vmatprep.subr.mxu0 0.0
    %230 = vmatpush2.msra.mxu0 %v182
    %231 = vmatprep.subr.mxu0 0.0
    %232 = vmatpush2.msra.mxu0 %v181
    %233 = vmatprep.subr.mxu0 0.0
    %234 = vmatpush2.msra.mxu0 %v180
    %235 = vmatprep.subr.mxu0 0.0
    %236 = vmatpush2.msra.mxu0 %v179
    %237 = vmatprep.subr.mxu0 0.0
    %238 = vmatpush2.msra.mxu0 %v178
    %239 = vmatprep.subr.mxu0 0.0
    %240 = vmatpush2.msra.mxu0 %v177
    %241 = vmatprep.subr.mxu0 0.0
    %242 = vmatpush2.msra.mxu0 %v176
    %243 = vmatprep.subr.mxu0 0.0
    %244 = vmatpush2.msra.mxu0 %v175
    %245 = vmatprep.subr.mxu0 0.0
    %246 = vmatpush2.msra.mxu0 %v174
    %247 = vmatprep.subr.mxu0 0.0
    %248 = vmatpush2.msra.mxu0 %v173
    %249 = vmatprep.subr.mxu0 0.0
    %250 = vmatpush2.msra.mxu0 %v172
    %251 = vmatprep.subr.mxu0 0.0
    %252 = vmatpush2.msra.mxu0 %v171
    %253 = vmatprep.mubr.f32.mxu0 %v154
    %254 = vmatmul.mubr.f32.gmra.mxu0 %v153
    %v255 = vpop.f32.mrf.mxu0
    %v256 = vadd.f32 0.0, %v255
    %v257 = vpop.f32.mrf.mxu0
    %258 = vdwg.mxu0
    %v259 = vrot.slane %v256, 4
    %v260 = vadd.f32 %v256, %v259
    %v261 = vrot.slane %v260, 2
    %v262 = vadd.f32 %v260, %v261
    %v263 = vrot.slane %v262, 1
    %v264 = vadd.f32 %v262, %v263
    %v265 = vmul.f32 %v264, 0.125
    %v266 = vmul.f32 %v256, %v256
    %v267 = vrot.slane %v266, 4
    %v268 = vadd.f32 %v266, %v267
    %v269 = vrot.slane %v268, 2
    %v270 = vadd.f32 %v268, %v269
    %v271 = vrot.slane %v270, 1
    %v272 = vadd.f32 %v270, %v271
    %v273 = vmul.f32 %v272, 0.125
    %v274 = vmul.f32 %v265, %v265
    %v275 = vsub.f32 %v273, %v274
    %v276 = vadd.f32 %v275, 1e-05
    %v277 = vrsqrt.pop %v276
    %v278 = vmul.f32 %v187, %v277
    %v279 = vmul.f32 %v265, %v278
    %v280 = vsub.f32 %v188, %v279
    %v282 = vlaneseq
    %v283 = vshrl.u32 %v282, 7
    %v284 = vsub.s32 0, %v283
    %v285 = vrot.slane %v278, %v284
    %v287 = vmul.f32 %v256, %v285
    %v289 = vlaneseq
    %v290 = vshrl.u32 %v289, 7
    %v291 = vsub.s32 0, %v290
    %v292 = vrot.slane %v280, %v291
    %v294 = vadd.f32 %v287, %v292
    %v295 = vmax.f32 %v294, 0.0
    %v296 = vld [vmem:[%s5] sm:$0xff]
    %v297 = vld [vmem:[%s5 + $0x8] sm:$0xff]
    %v298 = vld [vmem:[%s5 + $0x10] sm:$0xff]
    %v299 = vld [vmem:[%s5 + $0x18] sm:$0xff]
    %v300 = vld [vmem:[%s5 + $0x20] sm:$0xff]
    %v301 = vld [vmem:[%s5 + $0x28] sm:$0xff]
    %v302 = vld [vmem:[%s5 + $0x30] sm:$0xff]
    %v303 = vld [vmem:[%s5 + $0x38] sm:$0xff]
    %v304 = vld [vmem:[%s5 + $0x40] sm:$0xff]
    %v305 = vld [vmem:[%s5 + $0x48] sm:$0xff]
    %v306 = vld [vmem:[%s5 + $0x50] sm:$0xff]
    %v307 = vld [vmem:[%s5 + $0x58] sm:$0xff]
    %v308 = vld [vmem:[%s5 + $0x60] sm:$0xff]
    %v309 = vld [vmem:[%s5 + $0x68] sm:$0xff]
    %v310 = vld [vmem:[%s5 + $0x70] sm:$0xff]
    %v311 = vld [vmem:[%s5 + $0x78] sm:$0xff]
    %v312 = vld [vmem:[%s6] sm:$0x1]
    %v313 = vld [vmem:[%s7] sm:$0x1]
    %314 = vmatprep.subr.mxu0 0.0
    %315 = vmatpush1.msra.mxu0 %v311
    %316 = vmatprep.subr.mxu0 0.0
    %317 = vmatpush1.msra.mxu0 %v310
    %318 = vmatprep.subr.mxu0 0.0
    %319 = vmatpush1.msra.mxu0 %v309
    %320 = vmatprep.subr.mxu0 0.0
    %321 = vmatpush1.msra.mxu0 %v308
    %322 = vmatprep.subr.mxu0 0.0
    %323 = vmatpush1.msra.mxu0 %v307
    %324 = vmatprep.subr.mxu0 0.0
    %325 = vmatpush1.msra.mxu0 %v306
    %326 = vmatprep.subr.mxu0 0.0
    %327 = vmatpush1.msra.mxu0 %v305
    %328 = vmatprep.subr.mxu0 0.0
    %329 = vmatpush1.msra.mxu0 %v304
    %330 = vmatprep.subr.mxu0 0.0
    %331 = vmatpush1.msra.mxu0 %v303
    %332 = vmatprep.subr.mxu0 0.0
    %333 = vmatpush1.msra.mxu0 %v302
    %334 = vmatprep.subr.mxu0 0.0
    %335 = vmatpush1.msra.mxu0 %v301
    %336 = vmatprep.subr.mxu0 0.0
    %337 = vmatpush1.msra.mxu0 %v300
    %338 = vmatprep.subr.mxu0 0.0
    %339 = vmatpush1.msra.mxu0 %v299
    %340 = vmatprep.subr.mxu0 0.0
    %341 = vmatpush1.msra.mxu0 %v298
    %342 = vmatprep.subr.mxu0 0.0
    %343 = vmatpush1.msra.mxu0 %v297
    %344 = vmatprep.subr.mxu0 0.0
    %345 = vmatpush1.msra.mxu0 %v296
    %346 = vmatprep.subr.mxu0 0.0
    %347 = vmatpush2.msra.mxu0 0.0
    %348 = vmatprep.subr.mxu0 0.0
    %349 = vmatpush2.msra.mxu0 0.0
    %350 = vmatprep.subr.mxu0 0.0
    %351 = vmatpush2.msra.mxu0 0.0
    %352 = vmatprep.subr.mxu0 0.0
    %353 = vmatpush2.msra.mxu0 0.0
    %354 = vmatprep.subr.mxu0 0.0
    %355 = vmatpush2.msra.mxu0 0.0
    %356 = vmatprep.subr.mxu0 0.0
    %357 = vmatpush2.msra.mxu0 0.0
    %358 = vmatprep.subr.mxu0 0.0
    %359 = vmatpush2.msra.mxu0 0.0
    %360 = vmatprep.subr.mxu0 0.0
    %361 = vmatpush2.msra.mxu0 0.0
    %362 = vmatprep.subr.mxu0 0.0
    %363 = vmatpush2.msra.mxu0 0.0
    %364 = vmatprep.subr.mxu0 0.0
    %365 = vmatpush2.msra.mxu0 0.0
    %366 = vmatprep.subr.mxu0 0.0
    %367 = vmatpush2.msra.mxu0 0.0
    %368 = vmatprep.subr.mxu0 0.0
    %369 = vmatpush2.msra.mxu0 0.0
    %370 = vmatprep.subr.mxu0 0.0
    %371 = vmatpush2.msra.mxu0 0.0
    %372 = vmatprep.subr.mxu0 0.0
    %373 = vmatpush2.msra.mxu0 0.0
    %374 = vmatprep.subr.mxu0 0.0
    %375 = vmatpush2.msra.mxu0 0.0
    %376 = vmatprep.subr.mxu0 0.0
    %377 = vmatpush2.msra.mxu0 0.0
    %378 = vmatprep.mubr.f32.mxu0 0.0
    %379 = vmatmul.mubr.f32.gmra.mxu0 %v295
    %v380 = vpop.f32.mrf.mxu0
    %v381 = vadd.f32 0.0, %v380
    %v382 = vpop.f32.mrf.mxu0
    %383 = vdwg.mxu0
    %v384 = vrot.slane %v381, 4
    %v385 = vadd.f32 %v381, %v384
    %v386 = vrot.slane %v385, 2
    %v387 = vadd.f32 %v385, %v386
    %v388 = vrot.slane %v387, 1
    %v389 = vadd.f32 %v387, %v388
    %v390 = vmul.f32 %v389, 0.125
    %v391 = vmul.f32 %v381, %v381
    %v392 = vrot.slane %v391, 4
    %v393 = vadd.f32 %v391, %v392
    %v394 = vrot.slane %v393, 2
    %v395 = vadd.f32 %v393, %v394
    %v396 = vrot.slane %v395, 1
    %v397 = vadd.f32 %v395, %v396
    %v398 = vmul.f32 %v397, 0.125
    %v399 = vmul.f32 %v390, %v390
    %v400 = vsub.f32 %v398, %v399
    %v401 = vadd.f32 %v400, 1e-05
    %v402 = vrsqrt.pop %v401
    %v403 = vmul.f32 %v312, %v402
    %v404 = vmul.f32 %v390, %v403
    %v405 = vsub.f32 %v313, %v404
    %v407 = vlaneseq
    %v408 = vshrl.u32 %v407, 7
    %v409 = vsub.s32 0, %v408
    %v410 = vrot.slane %v403, %v409
    %v412 = vmul.f32 %v381, %v410
    %v414 = vlaneseq
    %v415 = vshrl.u32 %v414, 7
    %v416 = vsub.s32 0, %v415
    %v417 = vrot.slane %v405, %v416
    %v419 = vadd.f32 %v412, %v417
    %v420 = vmax.f32 %v419, 0.0
    %v421 = vld [vmem:[%s8] sm:$0xff]
    %v422 = vld [vmem:[%s8 + $0x8] sm:$0xff]
    %v423 = vld [vmem:[%s8 + $0x10] sm:$0xff]
    %v424 = vld [vmem:[%s8 + $0x18] sm:$0xff]
    %v425 = vld [vmem:[%s8 + $0x20] sm:$0xff]
    %v426 = vld [vmem:[%s8 + $0x28] sm:$0xff]
    %v427 = vld [vmem:[%s8 + $0x30] sm:$0xff]
    %v428 = vld [vmem:[%s8 + $0x38] sm:$0xff]
    %v429 = vld [vmem:[%s8 + $0x40] sm:$0xff]
    %v430 = vld [vmem:[%s8 + $0x48] sm:$0xff]
    %v431 = vld [vmem:[%s8 + $0x50] sm:$0xff]
    %v432 = vld [vmem:[%s8 + $0x58] sm:$0xff]
    %v433 = vld [vmem:[%s8 + $0x60] sm:$0xff]
    %v434 = vld [vmem:[%s8 + $0x68] sm:$0xff]
    %v435 = vld [vmem:[%s8 + $0x70] sm:$0xff]
    %v436 = vld [vmem:[%s8 + $0x78] sm:$0xff]
    %v437 = vld [vmem:[%s9] sm:$0x1]
    %v438 = vld [vmem:[%s10] sm:$0x1]
    %439 = vmatprep.subr.mxu0 0.0
    %440 = vmatpush1.msra.mxu0 %v436
    %441 = vmatprep.subr.mxu0 0.0
    %442 = vmatpush1.msra.mxu0 %v435
    %443 = vmatprep.subr.mxu0 0.0
    %444 = vmatpush1.msra.mxu0 %v434
    %445 = vmatprep.subr.mxu0 0.0
    %446 = vmatpush1.msra.mxu0 %v433
    %447 = vmatprep.subr.mxu0 0.0
    %448 = vmatpush1.msra.mxu0 %v432
    %449 = vmatprep.subr.mxu0 0.0
    %450 = vmatpush1.msra.mxu0 %v431
    %451 = vmatprep.subr.mxu0 0.0
    %452 = vmatpush1.msra.mxu0 %v430
    %453 = vmatprep.subr.mxu0 0.0
    %454 = vmatpush1.msra.mxu0 %v429
    %455 = vmatprep.subr.mxu0 0.0
    %456 = vmatpush1.msra.mxu0 %v428
    %457 = vmatprep.subr.mxu0 0.0
    %458 = vmatpush1.msra.mxu0 %v427
    %459 = vmatprep.subr.mxu0 0.0
    %460 = vmatpush1.msra.mxu0 %v426
    %461 = vmatprep.subr.mxu0 0.0
    %462 = vmatpush1.msra.mxu0 %v425
    %463 = vmatprep.subr.mxu0 0.0
    %464 = vmatpush1.msra.mxu0 %v424
    %465 = vmatprep.subr.mxu0 0.0
    %466 = vmatpush1.msra.mxu0 %v423
    %467 = vmatprep.subr.mxu0 0.0
    %468 = vmatpush1.msra.mxu0 %v422
    %469 = vmatprep.subr.mxu0 0.0
    %470 = vmatpush1.msra.mxu0 %v421
    %471 = vmatprep.subr.mxu0 0.0
    %472 = vmatpush2.msra.mxu0 0.0
    %473 = vmatprep.subr.mxu0 0.0
    %474 = vmatpush2.msra.mxu0 0.0
    %475 = vmatprep.subr.mxu0 0.0
    %476 = vmatpush2.msra.mxu0 0.0
    %477 = vmatprep.subr.mxu0 0.0
    %478 = vmatpush2.msra.mxu0 0.0
    %479 = vmatprep.subr.mxu0 0.0
    %480 = vmatpush2.msra.mxu0 0.0
    %481 = vmatprep.subr.mxu0 0.0
    %482 = vmatpush2.msra.mxu0 0.0
    %483 = vmatprep.subr.mxu0 0.0
    %484 = vmatpush2.msra.mxu0 0.0
    %485 = vmatprep.subr.mxu0 0.0
    %486 = vmatpush2.msra.mxu0 0.0
    %487 = vmatprep.subr.mxu0 0.0
    %488 = vmatpush2.msra.mxu0 0.0
    %489 = vmatprep.subr.mxu0 0.0
    %490 = vmatpush2.msra.mxu0 0.0
    %491 = vmatprep.subr.mxu0 0.0
    %492 = vmatpush2.msra.mxu0 0.0
    %493 = vmatprep.subr.mxu0 0.0
    %494 = vmatpush2.msra.mxu0 0.0
    %495 = vmatprep.subr.mxu0 0.0
    %496 = vmatpush2.msra.mxu0 0.0
    %497 = vmatprep.subr.mxu0 0.0
    %498 = vmatpush2.msra.mxu0 0.0
    %499 = vmatprep.subr.mxu0 0.0
    %500 = vmatpush2.msra.mxu0 0.0
    %501 = vmatprep.subr.mxu0 0.0
    %502 = vmatpush2.msra.mxu0 0.0
    %503 = vmatprep.mubr.f32.mxu0 0.0
    %504 = vmatmul.mubr.f32.gmra.mxu0 %v420
    %v505 = vpop.f32.mrf.mxu0
    %v506 = vadd.f32 0.0, %v505
    %v507 = vpop.f32.mrf.mxu0
    %508 = vdwg.mxu0
    %vm509 = vcmask 523264
    %v510 = vsel %vm509, %v506, 0.0
    %v511 = vrot.slane %v510, 4
    %v512 = vadd.f32 %v510, %v511
    %v513 = vrot.slane %v512, 2
    %v514 = vadd.f32 %v512, %v513
    %v515 = vrot.slane %v514, 1
    %v516 = vadd.f32 %v514, %v515
    %v517 = vmul.f32 %v516, 0.125
    %v518 = vmul.f32 %v506, %v506
    %v519 = vsel %vm509, %v518, 0.0
    %v520 = vrot.slane %v519, 4
    %v521 = vadd.f32 %v519, %v520
    %v522 = vrot.slane %v521, 2
    %v523 = vadd.f32 %v521, %v522
    %v524 = vrot.slane %v523, 1
    %v525 = vadd.f32 %v523, %v524
    %v526 = vmul.f32 %v525, 0.125
    %v527 = vmul.f32 %v517, %v517
    %v528 = vsub.f32 %v526, %v527
    %v529 = vadd.f32 %v528, 1e-05
    %v530 = vrsqrt.pop %v529
    %v531 = vmul.f32 %v437, %v530
    %v532 = vmul.f32 %v517, %v531
    %v533 = vsub.f32 %v438, %v532
    %v535 = vlaneseq
    %v536 = vshrl.u32 %v535, 7
    %v537 = vsub.s32 0, %v536
    %v538 = vrot.slane %v531, %v537
    %v540 = vmul.f32 %v506, %v538
    %v542 = vlaneseq
    %v543 = vshrl.u32 %v542, 7
    %v544 = vsub.s32 0, %v543
    %v545 = vrot.slane %v533, %v544
    %v547 = vadd.f32 %v540, %v545
    %v548 = vmax.f32 %v547, 0.0
    %v549 = vld [vmem:[#allocation5] sm:$0xff]
    %v550 = vld [vmem:[#allocation7] sm:$0xff]
    %v551 = vld [vmem:[#allocation7 + $0x8] sm:$0xff]
    %v552 = vld [vmem:[#allocation7 + $0x10] sm:$0xff]
    %v553 = vld [vmem:[#allocation7 + $0x18] sm:$0xff]
    %v554 = vld [vmem:[#allocation7 + $0x20] sm:$0xff]
    %v555 = vld [vmem:[#allocation7 + $0x28] sm:$0xff]
    %v556 = vld [vmem:[#allocation7 + $0x30] sm:$0xff]
    %v557 = vld [vmem:[#allocation7 + $0x38] sm:$0xff]
    %v558 = vld [vmem:[#allocation7 + $0x40] sm:$0xff]
    %v559 = vld [vmem:[#allocation7 + $0x48] sm:$0xff]
    %v560 = vld [vmem:[#allocation7 + $0x50] sm:$0xff]
    %v561 = vld [vmem:[#allocation7 + $0x58] sm:$0xff]
    %v562 = vld [vmem:[#allocation7 + $0x60] sm:$0xff]
    %v563 = vld [vmem:[#allocation7 + $0x68] sm:$0xff]
    %v564 = vld [vmem:[#allocation7 + $0x70] sm:$0xff]
    %v565 = vld [vmem:[#allocation7 + $0x78] sm:$0xff]
    %v566 = vld [vmem:[%s12] sm:$0x1]
    %v567 = vld [vmem:[%s13] sm:$0x1]
    %568 = vmatprep.subr.mxu0 0.0
    %569 = vmatpush1.msra.mxu0 %v565
    %570 = vmatprep.subr.mxu0 0.0
    %571 = vmatpush1.msra.mxu0 %v564
    %572 = vmatprep.subr.mxu0 0.0
    %573 = vmatpush1.msra.mxu0 %v563
    %574 = vmatprep.subr.mxu0 0.0
    %575 = vmatpush1.msra.mxu0 %v562
    %576 = vmatprep.subr.mxu0 0.0
    %577 = vmatpush1.msra.mxu0 %v561
    %578 = vmatprep.subr.mxu0 0.0
    %579 = vmatpush1.msra.mxu0 %v560
    %580 = vmatprep.subr.mxu0 0.0
    %581 = vmatpush1.msra.mxu0 %v559
    %582 = vmatprep.subr.mxu0 0.0
    %583 = vmatpush1.msra.mxu0 %v558
    %584 = vmatprep.subr.mxu0 0.0
    %585 = vmatpush1.msra.mxu0 %v557
    %586 = vmatprep.subr.mxu0 0.0
    %587 = vmatpush1.msra.mxu0 %v556
    %588 = vmatprep.subr.mxu0 0.0
    %589 = vmatpush1.msra.mxu0 %v555
    %590 = vmatprep.subr.mxu0 0.0
    %591 = vmatpush1.msra.mxu0 %v554
    %592 = vmatprep.subr.mxu0 0.0
    %593 = vmatpush1.msra.mxu0 %v553
    %594 = vmatprep.subr.mxu0 0.0
    %595 = vmatpush1.msra.mxu0 %v552
    %596 = vmatprep.subr.mxu0 0.0
    %597 = vmatpush1.msra.mxu0 %v551
    %598 = vmatprep.subr.mxu0 0.0
    %599 = vmatpush1.msra.mxu0 %v550
    %600 = vmatprep.subr.mxu0 0.0
    %601 = vmatpush2.msra.mxu0 0.0
    %602 = vmatprep.subr.mxu0 0.0
    %603 = vmatpush2.msra.mxu0 0.0
    %604 = vmatprep.subr.mxu0 0.0
    %605 = vmatpush2.msra.mxu0 0.0
    %606 = vmatprep.subr.mxu0 0.0
    %607 = vmatpush2.msra.mxu0 0.0
    %608 = vmatprep.subr.mxu0 0.0
    %609 = vmatpush2.msra.mxu0 0.0
    %610 = vmatprep.subr.mxu0 0.0
    %611 = vmatpush2.msra.mxu0 0.0
    %612 = vmatprep.subr.mxu0 0.0
    %613 = vmatpush2.msra.mxu0 0.0
    %614 = vmatprep.subr.mxu0 0.0
    %615 = vmatpush2.msra.mxu0 0.0
    %616 = vmatprep.subr.mxu0 0.0
    %617 = vmatpush2.msra.mxu0 0.0
    %618 = vmatprep.subr.mxu0 0.0
    %619 = vmatpush2.msra.mxu0 0.0
    %620 = vmatprep.subr.mxu0 0.0
    %621 = vmatpush2.msra.mxu0 0.0
    %622 = vmatprep.subr.mxu0 0.0
    %623 = vmatpush2.msra.mxu0 0.0
    %624 = vmatprep.subr.mxu0 0.0
    %625 = vmatpush2.msra.mxu0 0.0
    %626 = vmatprep.subr.mxu0 0.0
    %627 = vmatpush2.msra.mxu0 0.0
    %628 = vmatprep.subr.mxu0 0.0
    %629 = vmatpush2.msra.mxu0 0.0
    %630 = vmatprep.subr.mxu0 0.0
    %631 = vmatpush2.msra.mxu0 0.0
    %632 = vmatprep.mubr.f32.mxu0 0.0
    %633 = vmatmul.mubr.f32.gmra.mxu0 %v549
    %v634 = vpop.f32.mrf.mxu0
    %v635 = vadd.f32 0.0, %v634
    %v636 = vpop.f32.mrf.mxu0
    %637 = vdwg.mxu0
    %v638 = vrot.slane %v635, 4
    %v639 = vadd.f32 %v635, %v638
    %v640 = vrot.slane %v639, 2
    %v641 = vadd.f32 %v639, %v640
    %v642 = vrot.slane %v641, 1
    %v643 = vadd.f32 %v641, %v642
    %v644 = vmul.f32 %v643, 0.125
    %v645 = vmul.f32 %v635, %v635
    %v646 = vrot.slane %v645, 4
    %v647 = vadd.f32 %v645, %v646
    %v648 = vrot.slane %v647, 2
    %v649 = vadd.f32 %v647, %v648
    %v650 = vrot.slane %v649, 1
    %v651 = vadd.f32 %v649, %v650
    %v652 = vmul.f32 %v651, 0.125
    %v653 = vmul.f32 %v644, %v644
    %v654 = vsub.f32 %v652, %v653
    %v655 = vadd.f32 %v654, 1e-05
    %v656 = vrsqrt.pop %v655
    %v657 = vmul.f32 %v566, %v656
    %v658 = vmul.f32 %v644, %v657
    %v659 = vsub.f32 %v567, %v658
    %v661 = vlaneseq
    %v662 = vshrl.u32 %v661, 7
    %v663 = vsub.s32 0, %v662
    %v664 = vrot.slane %v657, %v663
    %v666 = vmul.f32 %v635, %v664
    %v668 = vlaneseq
    %v669 = vshrl.u32 %v668, 7
    %v670 = vsub.s32 0, %v669
    %v671 = vrot.slane %v659, %v670
    %v673 = vadd.f32 %v666, %v671
    %v674 = vmax.f32 %v673, 0.0
    %v675 = vld [vmem:[#allocation8] sm:$0xff]
    %v676 = vld [vmem:[#allocation8 + $0x8] sm:$0xff]
    %v677 = vld [vmem:[#allocation8 + $0x10] sm:$0xff]
    %v678 = vld [vmem:[#allocation8 + $0x18] sm:$0xff]
    %v679 = vld [vmem:[#allocation8 + $0x20] sm:$0xff]
    %v680 = vld [vmem:[#allocation8 + $0x28] sm:$0xff]
    %v681 = vld [vmem:[#allocation8 + $0x30] sm:$0xff]
    %v682 = vld [vmem:[#allocation8 + $0x38] sm:$0xff]
    %v683 = vld [vmem:[#allocation8 + $0x40] sm:$0xff]
    %v684 = vld [vmem:[#allocation8 + $0x48] sm:$0xff]
    %v685 = vld [vmem:[#allocation8 + $0x50] sm:$0xff]
    %v686 = vld [vmem:[#allocation8 + $0x58] sm:$0xff]
    %v687 = vld [vmem:[#allocation8 + $0x60] sm:$0xff]
    %v688 = vld [vmem:[#allocation8 + $0x68] sm:$0xff]
    %v689 = vld [vmem:[#allocation8 + $0x70] sm:$0xff]
    %v690 = vld [vmem:[#allocation8 + $0x78] sm:$0xff]
    %v691 = vld [vmem:[%s15] sm:$0x1]
    %v692 = vld [vmem:[%s16] sm:$0x1]
    %693 = vmatprep.subr.mxu0 0.0
    %694 = vmatpush1.msra.mxu0 %v690
    %695 = vmatprep.subr.mxu0 0.0
    %696 = vmatpush1.msra.mxu0 %v689
    %697 = vmatprep.subr.mxu0 0.0
    %698 = vmatpush1.msra.mxu0 %v688
    %699 = vmatprep.subr.mxu0 0.0
    %700 = vmatpush1.msra.mxu0 %v687
    %701 = vmatprep.subr.mxu0 0.0
    %702 = vmatpush1.msra.mxu0 %v686
    %703 = vmatprep.subr.mxu0 0.0
    %704 = vmatpush1.msra.mxu0 %v685
    %705 = vmatprep.subr.mxu0 0.0
    %706 = vmatpush1.msra.mxu0 %v684
    %707 = vmatprep.subr.mxu0 0.0
    %708 = vmatpush1.msra.mxu0 %v683
    %709 = vmatprep.subr.mxu0 0.0
    %710 = vmatpush1.msra.mxu0 %v682
    %711 = vmatprep.subr.mxu0 0.0
    %712 = vmatpush1.msra.mxu0 %v681
    %713 = vmatprep.subr.mxu0 0.0
    %714 = vmatpush1.msra.mxu0 %v680
    %715 = vmatprep.subr.mxu0 0.0
    %716 = vmatpush1.msra.mxu0 %v679
    %717 = vmatprep.subr.mxu0 0.0
    %718 = vmatpush1.msra.mxu0 %v678
    %719 = vmatprep.subr.mxu0 0.0
    %720 = vmatpush1.msra.mxu0 %v677
    %721 = vmatprep.subr.mxu0 0.0
    %722 = vmatpush1.msra.mxu0 %v676
    %723 = vmatprep.subr.mxu0 0.0
    %724 = vmatpush1.msra.mxu0 %v675
    %725 = vmatprep.subr.mxu0 0.0
    %726 = vmatpush2.msra.mxu0 0.0
    %727 = vmatprep.subr.mxu0 0.0
    %728 = vmatpush2.msra.mxu0 0.0
    %729 = vmatprep.subr.mxu0 0.0
    %730 = vmatpush2.msra.mxu0 0.0
    %731 = vmatprep.subr.mxu0 0.0
    %732 = vmatpush2.msra.mxu0 0.0
    %733 = vmatprep.subr.mxu0 0.0
    %734 = vmatpush2.msra.mxu0 0.0
    %735 = vmatprep.subr.mxu0 0.0
    %736 = vmatpush2.msra.mxu0 0.0
    %737 = vmatprep.subr.mxu0 0.0
    %738 = vmatpush2.msra.mxu0 0.0
    %739 = vmatprep.subr.mxu0 0.0
    %740 = vmatpush2.msra.mxu0 0.0
    %741 = vmatprep.subr.mxu0 0.0
    %742 = vmatpush2.msra.mxu0 0.0
    %743 = vmatprep.subr.mxu0 0.0
    %744 = vmatpush2.msra.mxu0 0.0
    %745 = vmatprep.subr.mxu0 0.0
    %746 = vmatpush2.msra.mxu0 0.0
    %747 = vmatprep.subr.mxu0 0.0
    %748 = vmatpush2.msra.mxu0 0.0
    %749 = vmatprep.subr.mxu0 0.0
    %750 = vmatpush2.msra.mxu0 0.0
    %751 = vmatprep.subr.mxu0 0.0
    %752 = vmatpush2.msra.mxu0 0.0
    %753 = vmatprep.subr.mxu0 0.0
    %754 = vmatpush2.msra.mxu0 0.0
    %755 = vmatprep.subr.mxu0 0.0
    %756 = vmatpush2.msra.mxu0 0.0
    %757 = vmatprep.mubr.f32.mxu0 0.0
    %758 = vmatmul.mubr.f32.gmra.mxu0 %v674
    %v759 = vpop.f32.mrf.mxu0
    %v760 = vadd.f32 0.0, %v759
    %v761 = vpop.f32.mrf.mxu0
    %762 = vdwg.mxu0
    %v763 = vrot.slane %v760, 4
    %v764 = vadd.f32 %v760, %v763
    %v765 = vrot.slane %v764, 2
    %v766 = vadd.f32 %v764, %v765
    %v767 = vrot.slane %v766, 1
    %v768 = vadd.f32 %v766, %v767
    %v769 = vmul.f32 %v768, 0.125
    %v770 = vmul.f32 %v760, %v760
    %v771 = vrot.slane %v770, 4
    %v772 = vadd.f32 %v770, %v771
    %v773 = vrot.slane %v772, 2
    %v774 = vadd.f32 %v772, %v773
    %v775 = vrot.slane %v774, 1
    %v776 = vadd.f32 %v774, %v775
    %v777 = vmul.f32 %v776, 0.125
    %v778 = vmul.f32 %v769, %v769
    %v779 = vsub.f32 %v777, %v778
    %v780 = vadd.f32 %v779, 1e-05
    %v781 = vrsqrt.pop %v780
    %v782 = vmul.f32 %v691, %v781
    %v783 = vmul.f32 %v769, %v782
    %v784 = vsub.f32 %v692, %v783
    %v786 = vlaneseq
    %v787 = vshrl.u32 %v786, 7
    %v788 = vsub.s32 0, %v787
    %v789 = vrot.slane %v782, %v788
    %v791 = vmul.f32 %v760, %v789
    %v793 = vlaneseq
    %v794 = vshrl.u32 %v793, 7
    %v795 = vsub.s32 0, %v794
    %v796 = vrot.slane %v784, %v795
    %v798 = vadd.f32 %v791, %v796
    %v799 = vmax.f32 %v798, 0.0
    %v800 = vld [vmem:[%s17] sm:$0xff]
    %v801 = vld [vmem:[%s17 + $0x8] sm:$0xff]
    %v802 = vld [vmem:[%s17 + $0x10] sm:$0xff]
    %v803 = vld [vmem:[%s17 + $0x18] sm:$0xff]
    %v804 = vld [vmem:[%s17 + $0x20] sm:$0xff]
    %v805 = vld [vmem:[%s17 + $0x28] sm:$0xff]
    %v806 = vld [vmem:[%s17 + $0x30] sm:$0xff]
    %v807 = vld [vmem:[%s17 + $0x38] sm:$0xff]
    %v808 = vld [vmem:[%s17 + $0x40] sm:$0xff]
    %v809 = vld [vmem:[%s17 + $0x48] sm:$0xff]
    %v810 = vld [vmem:[%s17 + $0x50] sm:$0xff]
    %v811 = vld [vmem:[%s17 + $0x58] sm:$0xff]
    %v812 = vld [vmem:[%s17 + $0x60] sm:$0xff]
    %v813 = vld [vmem:[%s17 + $0x68] sm:$0xff]
    %v814 = vld [vmem:[%s17 + $0x70] sm:$0xff]
    %v815 = vld [vmem:[%s17 + $0x78] sm:$0xff]
    %v816 = vld [vmem:[%s18] sm:$0x1]
    %v817 = vld [vmem:[%s19] sm:$0x1]
    %818 = vmatprep.subr.mxu0 0.0
    %819 = vmatpush1.msra.mxu0 %v815
    %820 = vmatprep.subr.mxu0 0.0
    %821 = vmatpush1.msra.mxu0 %v814
    %822 = vmatprep.subr.mxu0 0.0
    %823 = vmatpush1.msra.mxu0 %v813
    %824 = vmatprep.subr.mxu0 0.0
    %825 = vmatpush1.msra.mxu0 %v812
    %826 = vmatprep.subr.mxu0 0.0
    %827 = vmatpush1.msra.mxu0 %v811
    %828 = vmatprep.subr.mxu0 0.0
    %829 = vmatpush1.msra.mxu0 %v810
    %830 = vmatprep.subr.mxu0 0.0
    %831 = vmatpush1.msra.mxu0 %v809
    %832 = vmatprep.subr.mxu0 0.0
    %833 = vmatpush1.msra.mxu0 %v808
    %834 = vmatprep.subr.mxu0 0.0
    %835 = vmatpush1.msra.mxu0 %v807
    %836 = vmatprep.subr.mxu0 0.0
    %837 = vmatpush1.msra.mxu0 %v806
    %838 = vmatprep.subr.mxu0 0.0
    %839 = vmatpush1.msra.mxu0 %v805
    %840 = vmatprep.subr.mxu0 0.0
    %841 = vmatpush1.msra.mxu0 %v804
    %842 = vmatprep.subr.mxu0 0.0
    %843 = vmatpush1.msra.mxu0 %v803
    %844 = vmatprep.subr.mxu0 0.0
    %845 = vmatpush1.msra.mxu0 %v802
    %846 = vmatprep.subr.mxu0 0.0
    %847 = vmatpush1.msra.mxu0 %v801
    %848 = vmatprep.subr.mxu0 0.0
    %849 = vmatpush1.msra.mxu0 %v800
    %850 = vmatprep.subr.mxu0 0.0
    %851 = vmatpush2.msra.mxu0 0.0
    %852 = vmatprep.subr.mxu0 0.0
    %853 = vmatpush2.msra.mxu0 0.0
    %854 = vmatprep.subr.mxu0 0.0
    %855 = vmatpush2.msra.mxu0 0.0
    %856 = vmatprep.subr.mxu0 0.0
    %857 = vmatpush2.msra.mxu0 0.0
    %858 = vmatprep.subr.mxu0 0.0
    %859 = vmatpush2.msra.mxu0 0.0
    %860 = vmatprep.subr.mxu0 0.0
    %861 = vmatpush2.msra.mxu0 0.0
    %862 = vmatprep.subr.mxu0 0.0
    %863 = vmatpush2.msra.mxu0 0.0
    %864 = vmatprep.subr.mxu0 0.0
    %865 = vmatpush2.msra.mxu0 0.0
    %866 = vmatprep.subr.mxu0 0.0
    %867 = vmatpush2.msra.mxu0 0.0
    %868 = vmatprep.subr.mxu0 0.0
    %869 = vmatpush2.msra.mxu0 0.0
    %870 = vmatprep.subr.mxu0 0.0
    %871 = vmatpush2.msra.mxu0 0.0
    %872 = vmatprep.subr.mxu0 0.0
    %873 = vmatpush2.msra.mxu0 0.0
    %874 = vmatprep.subr.mxu0 0.0
    %875 = vmatpush2.msra.mxu0 0.0
    %876 = vmatprep.subr.mxu0 0.0
    %877 = vmatpush2.msra.mxu0 0.0
    %878 = vmatprep.subr.mxu0 0.0
    %879 = vmatpush2.msra.mxu0 0.0
    %880 = vmatprep.subr.mxu0 0.0
    %881 = vmatpush2.msra.mxu0 0.0
    %882 = vmatprep.mubr.f32.mxu0 0.0
    %883 = vmatmul.mubr.f32.gmra.mxu0 %v799
    %v884 = vpop.f32.mrf.mxu0
    %v885 = vadd.f32 0.0, %v884
    %v886 = vpop.f32.mrf.mxu0
    %887 = vdwg.mxu0
    %v888 = vsel %vm509, %v885, 0.0
    %v889 = vrot.slane %v888, 4
    %v890 = vadd.f32 %v888, %v889
    %v891 = vrot.slane %v890, 2
    %v892 = vadd.f32 %v890, %v891
    %v893 = vrot.slane %v892, 1
    %v894 = vadd.f32 %v892, %v893
    %v895 = vmul.f32 %v894, 0.125
    %v896 = vmul.f32 %v885, %v885
    %v897 = vsel %vm509, %v896, 0.0
    %v898 = vrot.slane %v897, 4
    %v899 = vadd.f32 %v897, %v898
    %v900 = vrot.slane %v899, 2
    %v901 = vadd.f32 %v899, %v900
    %v902 = vrot.slane %v901, 1
    %v903 = vadd.f32 %v901, %v902
    %v904 = vmul.f32 %v903, 0.125
    %v905 = vmul.f32 %v895, %v895
    %v906 = vsub.f32 %v904, %v905
    %v907 = vadd.f32 %v906, 1e-05
    %v908 = vrsqrt.pop %v907
    %v909 = vmul.f32 %v816, %v908
    %v910 = vmul.f32 %v895, %v909
    %v911 = vsub.f32 %v817, %v910
    %v913 = vlaneseq
    %v914 = vshrl.u32 %v913, 7
    %v915 = vsub.s32 0, %v914
    %v916 = vrot.slane %v909, %v915
    %v918 = vmul.f32 %v885, %v916
    %v920 = vlaneseq
    %v921 = vshrl.u32 %v920, 7
    %v922 = vsub.s32 0, %v921
    %v923 = vrot.slane %v911, %v922
    %v925 = vadd.f32 %v918, %v923
    %v926 = vmax.f32 %v925, 0.0
    %v927 = vld [vmem:[#allocation10] sm:$0xff]
    %v928 = vld [vmem:[#allocation10 + $0x8] sm:$0xff]
    %v929 = vld [vmem:[#allocation10 + $0x10] sm:$0xff]
    %v930 = vld [vmem:[#allocation10 + $0x18] sm:$0xff]
    %v931 = vld [vmem:[#allocation10 + $0x20] sm:$0xff]
    %v932 = vld [vmem:[#allocation10 + $0x28] sm:$0xff]
    %v933 = vld [vmem:[#allocation10 + $0x30] sm:$0xff]
    %v934 = vld [vmem:[#allocation10 + $0x38] sm:$0xff]
    %v936 = vsel %vm509, %v548, 0
    %938 = vmatprep.subr.mxu0 0.0
    %939 = vmatpush1.msra.mxu0 0.0
    %940 = vmatprep.subr.mxu0 0.0
    %941 = vmatpush1.msra.mxu0 0.0
    %942 = vmatprep.subr.mxu0 0.0
    %943 = vmatpush1.msra.mxu0 0.0
    %944 = vmatprep.subr.mxu0 0.0
    %945 = vmatpush1.msra.mxu0 0.0
    %946 = vmatprep.subr.mxu0 0.0
    %947 = vmatpush1.msra.mxu0 0.0
    %948 = vmatprep.subr.mxu0 0.0
    %949 = vmatpush1.msra.mxu0 0.0
    %950 = vmatprep.subr.mxu0 0.0
    %951 = vmatpush1.msra.mxu0 0.0
    %952 = vmatprep.subr.mxu0 0.0
    %953 = vmatpush1.msra.mxu0 0.0
    %954 = vmatprep.subr.mxu0 0.0
    %955 = vmatpush1.msra.mxu0 %v934
    %956 = vmatprep.subr.mxu0 0.0
    %957 = vmatpush1.msra.mxu0 %v933
    %958 = vmatprep.subr.mxu0 0.0
    %959 = vmatpush1.msra.mxu0 %v932
    %960 = vmatprep.subr.mxu0 0.0
    %961 = vmatpush1.msra.mxu0 %v931
    %962 = vmatprep.subr.mxu0 0.0
    %963 = vmatpush1.msra.mxu0 %v930
    %964 = vmatprep.subr.mxu0 0.0
    %965 = vmatpush1.msra.mxu0 %v929
    %966 = vmatprep.subr.mxu0 0.0
    %967 = vmatpush1.msra.mxu0 %v928
    %968 = vmatprep.subr.mxu0 0.0
    %969 = vmatpush1.msra.mxu0 %v927
    %970 = vmatprep.subr.mxu0 0.0
    %971 = vmatpush2.msra.mxu0 0.0
    %972 = vmatprep.subr.mxu0 0.0
    %973 = vmatpush2.msra.mxu0 0.0
    %974 = vmatprep.subr.mxu0 0.0
    %975 = vmatpush2.msra.mxu0 0.0
    %976 = vmatprep.subr.mxu0 0.0
    %977 = vmatpush2.msra.mxu0 0.0
    %978 = vmatprep.subr.mxu0 0.0
    %979 = vmatpush2.msra.mxu0 0.0
    %980 = vmatprep.subr.mxu0 0.0
    %981 = vmatpush2.msra.mxu0 0.0
    %982 = vmatprep.subr.mxu0 0.0
    %983 = vmatpush2.msra.mxu0 0.0
    %984 = vmatprep.subr.mxu0 0.0
    %985 = vmatpush2.msra.mxu0 0.0
    %986 = vmatprep.subr.mxu0 0.0
    %987 = vmatpush2.msra.mxu0 0.0
    %988 = vmatprep.subr.mxu0 0.0
    %989 = vmatpush2.msra.mxu0 0.0
    %990 = vmatprep.subr.mxu0 0.0
    %991 = vmatpush2.msra.mxu0 0.0
    %992 = vmatprep.subr.mxu0 0.0
    %993 = vmatpush2.msra.mxu0 0.0
    %994 = vmatprep.subr.mxu0 0.0
    %995 = vmatpush2.msra.mxu0 0.0
    %996 = vmatprep.subr.mxu0 0.0
    %997 = vmatpush2.msra.mxu0 0.0
    %998 = vmatprep.subr.mxu0 0.0
    %999 = vmatpush2.msra.mxu0 0.0
    %1000 = vmatprep.subr.mxu0 0.0
    %1001 = vmatpush2.msra.mxu0 0.0
    %1002 = vmatprep.mubr.f32.mxu0 0.0
    %1003 = vmatmul.mubr.f32.gmra.mxu0 %v936
    %v1004 = vpop.f32.mrf.mxu0
    %v1005 = vadd.f32 0.0, %v1004
    %v1006 = vpop.f32.mrf.mxu0
    %1007 = vdwg.mxu0
    %1008 = vst [vmem:[#allocation13] sm:$0xff] %v1005
    %v1009 = vld [vmem:[#allocation11] sm:$0xff]
    %v1010 = vld [vmem:[#allocation11 + $0x8] sm:$0xff]
    %v1011 = vld [vmem:[#allocation11 + $0x10] sm:$0xff]
    %v1012 = vld [vmem:[#allocation11 + $0x18] sm:$0xff]
    %v1013 = vld [vmem:[#allocation11 + $0x20] sm:$0xff]
    %v1014 = vld [vmem:[#allocation11 + $0x28] sm:$0xff]
    %v1015 = vld [vmem:[#allocation11 + $0x30] sm:$0xff]
    %v1016 = vld [vmem:[#allocation11 + $0x38] sm:$0xff]
    %v1018 = vsel %vm509, %v926, 0
    %1020 = vmatprep.subr.mxu0 0.0
    %1021 = vmatpush1.msra.mxu0 0.0
    %1022 = vmatprep.subr.mxu0 0.0
    %1023 = vmatpush1.msra.mxu0 0.0
    %1024 = vmatprep.subr.mxu0 0.0
    %1025 = vmatpush1.msra.mxu0 0.0
    %1026 = vmatprep.subr.mxu0 0.0
    %1027 = vmatpush1.msra.mxu0 0.0
    %1028 = vmatprep.subr.mxu0 0.0
    %1029 = vmatpush1.msra.mxu0 0.0
    %1030 = vmatprep.subr.mxu0 0.0
    %1031 = vmatpush1.msra.mxu0 0.0
    %1032 = vmatprep.subr.mxu0 0.0
    %1033 = vmatpush1.msra.mxu0 0.0
    %1034 = vmatprep.subr.mxu0 0.0
    %1035 = vmatpush1.msra.mxu0 0.0
    %1036 = vmatprep.subr.mxu0 0.0
    %1037 = vmatpush1.msra.mxu0 %v1016
    %1038 = vmatprep.subr.mxu0 0.0
    %1039 = vmatpush1.msra.mxu0 %v1015
    %1040 = vmatprep.subr.mxu0 0.0
    %1041 = vmatpush1.msra.mxu0 %v1014
    %1042 = vmatprep.subr.mxu0 0.0
    %1043 = vmatpush1.msra.mxu0 %v1013
    %1044 = vmatprep.subr.mxu0 0.0
    %1045 = vmatpush1.msra.mxu0 %v1012
    %1046 = vmatprep.subr.mxu0 0.0
    %1047 = vmatpush1.msra.mxu0 %v1011
    %1048 = vmatprep.subr.mxu0 0.0
    %1049 = vmatpush1.msra.mxu0 %v1010
    %1050 = vmatprep.subr.mxu0 0.0
    %1051 = vmatpush1.msra.mxu0 %v1009
    %1052 = vmatprep.subr.mxu0 0.0
    %1053 = vmatpush2.msra.mxu0 0.0
    %1054 = vmatprep.subr.mxu0 0.0
    %1055 = vmatpush2.msra.mxu0 0.0
    %1056 = vmatprep.subr.mxu0 0.0
    %1057 = vmatpush2.msra.mxu0 0.0
    %1058 = vmatprep.subr.mxu0 0.0
    %1059 = vmatpush2.msra.mxu0 0.0
    %1060 = vmatprep.subr.mxu0 0.0
    %1061 = vmatpush2.msra.mxu0 0.0
    %1062 = vmatprep.subr.mxu0 0.0
    %1063 = vmatpush2.msra.mxu0 0.0
    %1064 = vmatprep.subr.mxu0 0.0
    %1065 = vmatpush2.msra.mxu0 0.0
    %1066 = vmatprep.subr.mxu0 0.0
    %1067 = vmatpush2.msra.mxu0 0.0
    %1068 = vmatprep.subr.mxu0 0.0
    %1069 = vmatpush2.msra.mxu0 0.0
    %1070 = vmatprep.subr.mxu0 0.0
    %1071 = vmatpush2.msra.mxu0 0.0
    %1072 = vmatprep.subr.mxu0 0.0
    %1073 = vmatpush2.msra.mxu0 0.0
    %1074 = vmatprep.subr.mxu0 0.0
    %1075 = vmatpush2.msra.mxu0 0.0
    %1076 = vmatprep.subr.mxu0 0.0
    %1077 = vmatpush2.msra.mxu0 0.0
    %1078 = vmatprep.subr.mxu0 0.0
    %1079 = vmatpush2.msra.mxu0 0.0
    %1080 = vmatprep.subr.mxu0 0.0
    %1081 = vmatpush2.msra.mxu0 0.0
    %1082 = vmatprep.subr.mxu0 0.0
    %1083 = vmatpush2.msra.mxu0 0.0
    %1084 = vmatprep.mubr.f32.mxu0 0.0
    %1085 = vmatmul.mubr.f32.gmra.mxu0 %v1018
    %v1086 = vpop.f32.mrf.mxu0
    %v1087 = vadd.f32 0.0, %v1086
    %v1088 = vpop.f32.mrf.mxu0
    %1089 = vdwg.mxu0
    %1090 = vst [vmem:[#allocation14] sm:$0xff] %v1087
    // Predicated region
    $region114: #{tpu_custom_call.1} parent=1 // pred_check
      _
    $region115: #{tpu_custom_call.1} parent=1 // pred_check_branch
      %1092 = sbr.rel (0) target = $region117
    $region116: #{tpu_custom_call.1} parent=1 // pred_region
      %s1094 = ssub.s32 128, 128
      %1095 = vsyncadd [#allocation4], %s1094
      %s1097 = sshll.u32 [#allocation13], 4
      %s1098 = int_to_ptr.vmem [resolvable:$true] %s1097
      %1100 = dma.vmem_to_hbm [thread:$0]  %s1098, 128, %s22, [#allocation4]
    $region117: #{tpu_custom_call.1} parent=1 // pred_fallthru
      _
    // Predicated region
    $region118: #{tpu_custom_call.1} parent=1 // pred_check
      _
    $region119: #{tpu_custom_call.1} parent=1 // pred_check_branch
      %1102 = sbr.rel (0) target = $region121
    $region120: #{tpu_custom_call.1} parent=1 // pred_region
      %s1104 = ssub.s32 128, 128
      %1105 = vsyncadd [#allocation15], %s1104
      %s1107 = sshll.u32 [#allocation14], 4
      %s1108 = int_to_ptr.vmem [resolvable:$true] %s1107
      %1110 = dma.vmem_to_hbm [thread:$0]  %s1108, 128, %s23, [#allocation15]
    $region121: #{tpu_custom_call.1} parent=1 // pred_fallthru
      _
    // Predicated region
    $region122: #{tpu_custom_call.1} parent=1 // pred_check
      _
    $region123: #{tpu_custom_call.1} parent=1 // pred_check_branch
      %1112 = sbr.rel (0) target = $region125
    $region124: #{tpu_custom_call.1} parent=1 // pred_region
      %1113 = dma.done [#allocation4], 128
    $region125: #{tpu_custom_call.1} parent=1 // pred_fallthru
      _
    // Predicated region
    $region126: #{tpu_custom_call.1} parent=1 // pred_check
      _
    $region127: #{tpu_custom_call.1} parent=1 // pred_check_branch
      %1115 = sbr.rel (0) target = $region129
    $region128: #{tpu_custom_call.1} parent=1 // pred_region
      %1116 = dma.done [#allocation15], 128
    $region129: #{tpu_custom_call.1} parent=1 // pred_fallthru
      _
    %1117 = vsyncpa [#allocation3], 1
    %1118 = vsyncpa [#allocation6], 1
    %1119 = vsyncpa [#allocation9], 1
    %1120 = vsyncpa [#allocation12], 1
    %1121 = vsyncpa [#allocation4], 1
    %1122 = vsyncpa [#allocation15], 1

</llo_original>
